<compile_context>
chip_gen: v6e
topology: v6e:2x2x1
jax: 0.10.0
libtpu: 0.0.40
codegen_flags: <defaults>
</compile_context>

<pallas_src>
import jax
import jax.numpy as jnp
from jax.experimental import pallas as pl
from jax.experimental.pallas import tpu as pltpu


LANES = 128      # lane width of the packed slabs and of the fused output
Z_OFF = 64       # lane offset of z inside the fused (BN, 128) output


def _round8(n):
    return ((n + 7) // 8) * 8


# ------------------------------- fused forward ------------------------------ #

def cnngru_forward(x, params, feature_dim, num_classes):
    """x: (B, N, T) -> (lead_logits (B, N, num_classes), z (B*N, feature_dim))."""
    B, N, T = x.shape
    BN = B * N
    H = feature_dim
    f32 = jnp.float32

    (w1, s1, sh1), (w2, s2, sh2) = params["cnn"]
    K1, Cin1, C1 = w1.shape
    K2, Cin2, C2 = w2.shape
    wih, whh, bih, bhh = params["gru"]           # (C2,3H),(H,3H),(3H,),(3H,)
    wf1, bf1, wf2, bf2 = params["clf"]           # (H,CH),(CH,),(CH,NC),(NC,)
    CH = wf1.shape[1]

    T1, T2 = T // 2, T // 4
    p1, p2 = (K1 - 1) // 2, (K2 - 1) // 2

    # ---- correctness guards (per review) ----
    assert T % 4 == 0, "two MaxPool(2) stages require T % 4 == 0"
    assert K1 % 2 == 1 and K2 % 2 == 1, "'same' pad via (K-1)//2 needs odd kernels"
    assert Cin1 == 1 and Cin2 == C1
    assert T * C1 <= LANES and T1 * C2 <= LANES
    assert 3 * H <= LANES and CH <= LANES
    assert num_classes <= Z_OFF and Z_OFF + H <= LANES

    # -------------------- wrapper-side parameter packing -------------------- #
    # Fold eval-mode BatchNorm scale into conv weights (shift already carries
    # conv bias / beta / running-mean terms).
    w1e = (w1 * s1)[:, 0, :]                     # (K1, C1)
    w2e = w2 * s2                                # (K2, C1, C2)

    # Banded "same"-conv weights: the zero padding at sequence edges is encoded
    # in the band, so the kernel needs no padded scratch copies at all.
    ti = jnp.arange(T)
    tap1 = ti[:, None] - ti[None, :] + p1                        # t_in - t_out + p1
    valid1 = ((tap1 >= 0) & (tap1 < K1))[:, :, None]
    W1b = jnp.where(valid1, w1e[jnp.clip(tap1, 0, K1 - 1)], 0.0)  # (T, T, C1)
    W1b = W1b.reshape(T, T * C1)                                  # lane = t_out*C1 + c

    tj = jnp.arange(T1)
    tap2 = tj[:, None] - tj[None, :] + p2
    valid2 = ((tap2 >= 0) & (tap2 < K2))[:, :, None, None]
    W2b = jnp.where(valid2, w2e[jnp.clip(tap2, 0, K2 - 1)], 0.0)  # (T1,T1,C1,C2)
    W2b = W2b.transpose(0, 2, 1, 3).reshape(T1 * C1, T1 * C2)     # row=t_in*C1+ci

    # Static row offsets inside the single weight slab (all multiples of 8).
    o_w1 = 0
    o_w2 = o_w1 + _round8(T)
    o_wi = o_w2 + _round8(T1 * C1)
    o_wh = o_wi + _round8(C2)
    o_f1 = o_wh + _round8(H)
    o_wa = o_f1 + _round8(H)
    o_wb = o_wa + LANES                # classifier head block occupies LANES rows
    wrows = o_wb + _round8(H)

    wslab = jnp.zeros((wrows, LANES), f32)
    wslab = wslab.at[o_w1:o_w1 + T, :T * C1].set(W1b.astype(f32))
    wslab = wslab.at[o_w2:o_w2 + T1 * C1, :T1 * C2].set(W2b.astype(f32))
    wslab = wslab.at[o_wi:o_wi + C2, :3 * H].set(wih.astype(f32))       # [r|z|n]
    wslab = wslab.at[o_wh:o_wh + H, :3 * H].set(whh.astype(f32))        # [r|z|n]
    wslab = wslab.at[o_f1:o_f1 + H, :CH].set(wf1.astype(f32))
    wslab = wslab.at[o_wa:o_wa + CH, :num_classes].set(wf2.astype(f32))  # logits -> lanes [0,NC)
    wslab = wslab.at[o_wb:o_wb + H, Z_OFF:Z_OFF + H].set(jnp.eye(H, dtype=f32))  # z placement

    def _row(v):
        v = v.astype(f32).reshape(-1)
        return jnp.pad(v, (0, LANES - v.shape[0]))

    bi_rz = bih[:2 * H] + bhh[:2 * H]            # b_ir+b_hr | b_iz+b_hz folded
    bslab = jnp.stack([
        _row(jnp.tile(sh1, T)),                                   # 0: block-1 shift, tiled over t
        _row(jnp.tile(sh2, T1)),                                  # 1: block-2 shift, tiled over t
        _row(jnp.concatenate([bi_rz, bih[2 * H:]])),              # 2: GRU input bias [r|z|n]
        _row(bhh[2 * H:]),                                        # 3: b_hn (stays inside r*(.))
        _row(bf1),                                                # 4: classifier hidden bias
        _row(jnp.zeros((LANES,), f32).at[:num_classes].set(bf2)),  # 5: fused-output bias
        jnp.zeros((LANES,), f32),
        jnp.zeros((LANES,), f32),
    ])                                                            # (8, LANES)

    # ------------------------------ block sizing ----------------------------- #
    # At toy sizes grid=(1,). For non-toy BN pick a multiple-of-8 block so the
    # parallel grid axis gives >=2 blocks (v7x second TensorCore) and the
    # per-block working set stays far below v7x's 64 MiB VMEM (raise
    # vmem_limit_bytes via CompilerParams if BN_BLOCK is pushed into the 1000s).
    BN_BLOCK = BN
    if BN > 512:
        for cand in (512, 256, 128, 64, 32, 16, 8):
            if BN % cand == 0:
                BN_BLOCK = cand
                break
    assert BN % BN_BLOCK == 0
    grid = (BN // BN_BLOCK,)

    # ------------------------------- the kernel ------------------------------ #
    def kernel(x_ref, w_ref, b_ref, out_ref):
        bnb = x_ref.shape[0]
        ball = b_ref[...]                                    # (8, LANES) resident biases

        # -- CNN block 1: banded-matmul conv ('same' pad inside the band) + BN
        #    shift + ReLU + MaxPool(2). x stays lane-dense the whole way.
        xin = x_ref[...]                                     # (bnb, T)
        y1 = jnp.dot(xin, w_ref[o_w1:o_w1 + T, :],
                     preferred_element_type=jnp.float32) + ball[0:1, :]
        y1 = jnp.maximum(y1, 0.0)[:, :T * C1]                # lane = t*C1 + c
        y1 = y1.reshape(bnb, T1, 2 * C1)
        h1 = jnp.maximum(y1[:, :, :C1], y1[:, :, C1:])       # (bnb, T1, C1)

        # -- CNN block 2: same pattern, contraction over (time-tap x C1).
        y2 = jnp.dot(h1.reshape(bnb, T1 * C1), w_ref[o_w2:o_w2 + T1 * C1, :],
                     preferred_element_type=jnp.float32) + ball[1:2, :]
        y2 = jnp.maximum(y2, 0.0)[:, :T1 * C2]
        y2 = y2.reshape(bnb, T2, 2 * C2)
        h2 = jnp.maximum(y2[:, :, :C2], y2[:, :, C2:])       # (bnb, T2, C2)

        # -- GRU: all-gate input projection hoisted out of the recurrence.
        gx = jnp.dot(h2.reshape(bnb * T2, C2), w_ref[o_wi:o_wi + C2, :],
                     preferred_element_type=jnp.float32)
        gx = gx.reshape(bnb, T2, LANES) + ball[2:3, :]       # gates [r|z|n] in lanes 0:3H

        wh = w_ref[o_wh:o_wh + H, :]                         # merged W_hr|W_hz|W_hn, (H, LANES)
        b_hn = ball[3:4, :H]
        h = jnp.zeros((bnb, H), jnp.float32)
        # T2 == 4 -> static full unroll is the right call here.
        # TODO(synk): switch to lax.fori_loop(..., unroll=k) if T2 grows beyond ~8.
        for t in range(T2):
            gx_t = gx[:, t, :]
            gh = jnp.dot(h, wh, preferred_element_type=jnp.float32)   # ONE MXU op / step
            r = jax.nn.sigmoid(gx_t[:, :H] + gh[:, :H])
            zg = jax.nn.sigmoid(gx_t[:, H:2 * H] + gh[:, H:2 * H])
            n = jnp.tanh(gx_t[:, 2 * H:3 * H] + r * (gh[:, 2 * H:3 * H] + b_hn))
            h = (1.0 - zg) * n + zg * h                      # == out[:, -1, :] after loop

        # -- classifier + fused lane-dense output:
        #    lanes [0,NC) = logits, lanes [Z_OFF, Z_OFF+H) = z (via placement matmul).
        hid = jnp.maximum(
            jnp.dot(h, w_ref[o_f1:o_f1 + H, :],
                    preferred_element_type=jnp.float32) + ball[4:5, :], 0.0)
        out = (jnp.dot(hid, w_ref[o_wa:o_wa + LANES, :], preferred_element_type=jnp.float32)
               + jnp.dot(h, w_ref[o_wb:o_wb + H, :], preferred_element_type=jnp.float32)
               + ball[5:6, :])
        out_ref[...] = out                                   # one unmasked 128-lane store

    # ------------------------------- pallas_call ----------------------------- #
    x2d = x.reshape(BN, T).astype(f32)                       # lane-dense input, no size-1 dim

    out = pl.pallas_call(
        kernel,
        out_shape=jax.ShapeDtypeStruct((BN, LANES), f32),
        grid_spec=pltpu.PrefetchScalarGridSpec(
            num_scalar_prefetch=0,
            grid=grid,
            in_specs=[
                pl.BlockSpec((BN_BLOCK, T), lambda i: (i, 0)),
                pl.BlockSpec((wrows, LANES), lambda i: (0, 0)),   # weight slab, resident
                pl.BlockSpec((8, LANES), lambda i: (0, 0)),       # bias slab, resident
            ],
            out_specs=pl.BlockSpec((BN_BLOCK, LANES), lambda i: (i, 0)),
        ),
        compiler_params=pltpu.CompilerParams(
            dimension_semantics=("parallel",)),
    )(x2d, wslab, bslab)

    lead_logits = out[:, :num_classes].reshape(B, N, num_classes)
    z = out[:, Z_OFF:Z_OFF + H]
    return lead_logits, z


# --------------------------- plain-JAX reference ---------------------------- #

def reference_forward(x, params, feature_dim):
    B, N, T = x.shape
    h = x.reshape(B * N, T, 1)
    for (w, scale, shift) in params["cnn"]:
        K, Cin, Cout = w.shape
        p = (K - 1) // 2
        Tcur = h.shape[1]
        xp = jnp.pad(h, ((0, 0), (p, p), (0, 0)))
        acc = jnp.zeros((h.shape[0], Tcur, Cout), jnp.float32)
        for tap in range(K):
            acc = acc + jnp.einsum("btc,co->bto", xp[:, tap:tap + Tcur, :], w[tap])
        y = jnp.maximum(acc * scale + shift, 0.0)
        h = jnp.max(y.reshape(h.shape[0], Tcur // 2, 2, Cout), axis=2)
    wih, whh, bih, bhh = params["gru"]
    H = feature_dim
    hh = jnp.zeros((h.shape[0], H), jnp.float32)
    for t in range(h.shape[1]):
        xt = h[:, t, :]
        gx = xt @ wih + bih
        gh = hh @ whh + bhh
        r = jax.nn.sigmoid(gx[:, :H] + gh[:, :H])
        zg = jax.nn.sigmoid(gx[:, H:2 * H] + gh[:, H:2 * H])
        n = jnp.tanh(gx[:, 2 * H:] + r * gh[:, 2 * H:])
        hh = (1.0 - zg) * n + zg * hh
    z = hh
    w1, b1, w2, b2 = params["clf"]
    logits = jnp.maximum(z @ w1 + b1, 0.0) @ w2 + b2
    return logits.reshape(B, N, -1), z


# ------------------------------ parameter init ------------------------------ #

def make_params(key, blocks, feature_dim, clf_hidden, num_classes):
    keys = iter(jax.random.split(key, 64))
    params = {"cnn": [], "gru": None, "clf": None}
    eps = 1e-5
    for (cin, cout, k) in blocks:
        w = 0.3 * jax.random.normal(next(keys), (k, cin, cout), jnp.float32)
        bconv = 0.1 * jax.random.normal(next(keys), (cout,), jnp.float32)
        gamma = 1.0 + 0.1 * jax.random.normal(next(keys), (cout,), jnp.float32)
        beta = 0.1 * jax.random.normal(next(keys), (cout,), jnp.float32)
        rmean = 0.1 * jax.random.normal(next(keys), (cout,), jnp.float32)
        rvar = 1.0 + 0.1 * jax.random.uniform(next(keys), (cout,), jnp.float32)
        scale = gamma / jnp.sqrt(rvar + eps)
        shift = beta + scale * (bconv - rmean)   # conv bias folded (eval-mode BN)
        params["cnn"].append((w, scale, shift))

    cnn_out = blocks[-1][1]
    H = feature_dim
    wih = 0.2 * jax.random.normal(next(keys), (cnn_out, 3 * H), jnp.float32)
    whh = 0.2 * jax.random.normal(next(keys), (H, 3 * H), jnp.float32)
    bih = 0.1 * jax.random.normal(next(keys), (3 * H,), jnp.float32)
    bhh = 0.1 * jax.random.normal(next(keys), (3 * H,), jnp.float32)
    params["gru"] = (wih, whh, bih, bhh)

    w1 = 0.2 * jax.random.normal(next(keys), (H, clf_hidden), jnp.float32)
    b1 = 0.1 * jax.random.normal(next(keys), (clf_hidden,), jnp.float32)
    w2 = 0.2 * jax.random.normal(next(keys), (clf_hidden, num_classes), jnp.float32)
    b2 = 0.1 * jax.random.normal(next(keys), (num_classes,), jnp.float32)
    params["clf"] = (w1, b1, w2, b2)
    return params


# ----------------------------------- main ----------------------------------- #

if __name__ == "__main__":
    key = jax.random.PRNGKey(0)
    k_param, k_x = jax.random.split(key)

    B, N, T = 2, 4, 16
    feature_dim = 32
    num_classes = 5
    clf_hidden = 64
    blocks = [(1, 8, 3), (8, 16, 3)]   # (in_channels, out_channels, kernel_size)

    params = make_params(k_param, blocks, feature_dim, clf_hidden, num_classes)
    x = jax.random.normal(k_x, (B, N, T), jnp.float32)

    fwd = jax.jit(cnngru_forward, static_argnums=(2, 3))
    lead_logits, z = fwd(x, params, feature_dim, num_classes)
    jax.block_until_ready((lead_logits, z))

    ref_logits, ref_z = reference_forward(x, params, feature_dim)
    assert lead_logits.shape == (B, N, num_classes)
    assert z.shape == (B * N, feature_dim)
    assert jnp.allclose(lead_logits, ref_logits, atol=1e-2, rtol=1e-2)
    assert jnp.allclose(z, ref_z, atol=1e-2, rtol=1e-2)

    print("KERNEL_OK")
</pallas_src>

<mosaic_0001>
module attributes {stable_mosaic.version = 11 : i64} {
  func.func @kernel(%arg0: i32, %arg1: memref<8x16xf32, #tpu.memory_space<vmem>>, %arg2: memref<320x128xf32, #tpu.memory_space<vmem>>, %arg3: memref<8x128xf32, #tpu.memory_space<vmem>>, %arg4: memref<8x128xf32, #tpu.memory_space<vmem>>) attributes {dimension_semantics = [#tpu.dimension_semantics<parallel>], iteration_bounds = array<i64: 1>, scalar_prefetch = 0 : i64, scratch_operands = 0 : i64, tpu.core_type = #tpu.core_type<tc>, window_params = [{transform_indices = @transform_0, window_bounds = array<i64: 8, 16>}, {pipeline_mode = #tpu.pipeline_mode<synchronous>, transform_indices = @transform_1, window_bounds = array<i64: 320, 128>}, {pipeline_mode = #tpu.pipeline_mode<synchronous>, transform_indices = @transform_2, window_bounds = array<i64: 8, 128>}, {transform_indices = @transform_3, window_bounds = array<i64: 8, 128>}]} {
    %c0 = arith.constant 0 : index
    %c0_0 = arith.constant 0 : index
    %0 = vector.load %arg3[%c0, %c0_0] : memref<8x128xf32, #tpu.memory_space<vmem>>, vector<8x128xf32>
    %c0_1 = arith.constant 0 : index
    %c0_2 = arith.constant 0 : index
    %1 = vector.load %arg1[%c0_1, %c0_2] : memref<8x16xf32, #tpu.memory_space<vmem>>, vector<8x16xf32>
    %c0_3 = arith.constant 0 : index
    %c0_4 = arith.constant 0 : index
    %2 = vector.load %arg2[%c0_3, %c0_4] : memref<320x128xf32, #tpu.memory_space<vmem>>, vector<16x128xf32>
    %cst = arith.constant dense<0.000000e+00> : vector<8x128xf32>
    %3 = tpu.matmul %1, %2, %cst {dimension_numbers = #tpu.dot_dimension_numbers<[1], [0], [0], [1], [0, 0, 1, 1], [], []>} : vector<8x16xf32>, vector<16x128xf32>, vector<8x128xf32> -> vector<8x128xf32>
    %4 = vector.extract_strided_slice %0 {offsets = [0, 0], sizes = [1, 128], strides = [1, 1]} : vector<8x128xf32> to vector<1x128xf32>
    %5 = vector.broadcast %4 : vector<1x128xf32> to vector<8x128xf32>
    %6 = arith.addf %3, %5 : vector<8x128xf32>
    %cst_5 = arith.constant 0.000000e+00 : f32
    %7 = vector.broadcast %cst_5 : f32 to vector<8x128xf32>
    %8 = arith.maximumf %6, %7 : vector<8x128xf32>
    %9 = vector.shape_cast %8 : vector<8x128xf32> to vector<8x8x16xf32>
    %10 = vector.extract_strided_slice %9 {offsets = [0, 0, 0], sizes = [8, 8, 8], strides = [1, 1, 1]} : vector<8x8x16xf32> to vector<8x8x8xf32>
    %11 = vector.extract_strided_slice %9 {offsets = [0, 0, 8], sizes = [8, 8, 8], strides = [1, 1, 1]} : vector<8x8x16xf32> to vector<8x8x8xf32>
    %12 = arith.maximumf %10, %11 : vector<8x8x8xf32>
    %13 = vector.shape_cast %12 : vector<8x8x8xf32> to vector<8x64xf32>
    %c16 = arith.constant 16 : index
    %c0_6 = arith.constant 0 : index
    %14 = vector.load %arg2[%c16, %c0_6] : memref<320x128xf32, #tpu.memory_space<vmem>>, vector<64x128xf32>
    %cst_7 = arith.constant dense<0.000000e+00> : vector<8x128xf32>
    %15 = tpu.matmul %13, %14, %cst_7 {dimension_numbers = #tpu.dot_dimension_numbers<[1], [0], [0], [1], [0, 0, 1, 1], [], []>} : vector<8x64xf32>, vector<64x128xf32>, vector<8x128xf32> -> vector<8x128xf32>
    %16 = vector.extract_strided_slice %0 {offsets = [1, 0], sizes = [1, 128], strides = [1, 1]} : vector<8x128xf32> to vector<1x128xf32>
    %17 = vector.broadcast %16 : vector<1x128xf32> to vector<8x128xf32>
    %18 = arith.addf %15, %17 : vector<8x128xf32>
    %cst_8 = arith.constant 0.000000e+00 : f32
    %19 = vector.broadcast %cst_8 : f32 to vector<8x128xf32>
    %20 = arith.maximumf %18, %19 : vector<8x128xf32>
    %21 = vector.shape_cast %20 : vector<8x128xf32> to vector<8x4x32xf32>
    %22 = vector.extract_strided_slice %21 {offsets = [0, 0, 0], sizes = [8, 4, 16], strides = [1, 1, 1]} : vector<8x4x32xf32> to vector<8x4x16xf32>
    %23 = vector.extract_strided_slice %21 {offsets = [0, 0, 16], sizes = [8, 4, 16], strides = [1, 1, 1]} : vector<8x4x32xf32> to vector<8x4x16xf32>
    %24 = arith.maximumf %22, %23 : vector<8x4x16xf32>
    %25 = vector.shape_cast %24 : vector<8x4x16xf32> to vector<32x16xf32>
    %c80 = arith.constant 80 : index
    %c0_9 = arith.constant 0 : index
    %26 = vector.load %arg2[%c80, %c0_9] : memref<320x128xf32, #tpu.memory_space<vmem>>, vector<16x128xf32>
    %cst_10 = arith.constant dense<0.000000e+00> : vector<32x128xf32>
    %27 = tpu.matmul %25, %26, %cst_10 {dimension_numbers = #tpu.dot_dimension_numbers<[1], [0], [0], [1], [0, 0, 1, 1], [], []>} : vector<32x16xf32>, vector<16x128xf32>, vector<32x128xf32> -> vector<32x128xf32>
    %28 = vector.shape_cast %27 : vector<32x128xf32> to vector<8x4x128xf32>
    %29 = vector.extract_strided_slice %0 {offsets = [2, 0], sizes = [1, 128], strides = [1, 1]} : vector<8x128xf32> to vector<1x128xf32>
    %30 = vector.shape_cast %29 : vector<1x128xf32> to vector<1x1x128xf32>
    %31 = vector.broadcast %30 : vector<1x1x128xf32> to vector<8x4x128xf32>
    %32 = arith.addf %28, %31 : vector<8x4x128xf32>
    %c96 = arith.constant 96 : index
    %c0_11 = arith.constant 0 : index
    %33 = vector.load %arg2[%c96, %c0_11] : memref<320x128xf32, #tpu.memory_space<vmem>>, vector<32x128xf32>
    %34 = vector.extract_strided_slice %0 {offsets = [3, 0], sizes = [1, 32], strides = [1, 1]} : vector<8x128xf32> to vector<1x32xf32>
    %cst_12 = arith.constant 0.000000e+00 : f32
    %35 = vector.broadcast %cst_12 : f32 to vector<8x32xf32>
    %36 = vector.extract_strided_slice %32 {offsets = [0, 0, 0], sizes = [8, 1, 128], strides = [1, 1, 1]} : vector<8x4x128xf32> to vector<8x1x128xf32>
    %37 = vector.shape_cast %36 : vector<8x1x128xf32> to vector<8x128xf32>
    %cst_13 = arith.constant dense<0.000000e+00> : vector<8x128xf32>
    %38 = tpu.matmul %35, %33, %cst_13 {dimension_numbers = #tpu.dot_dimension_numbers<[1], [0], [0], [1], [0, 0, 1, 1], [], []>} : vector<8x32xf32>, vector<32x128xf32>, vector<8x128xf32> -> vector<8x128xf32>
    %39 = vector.extract_strided_slice %37 {offsets = [0, 0], sizes = [8, 32], strides = [1, 1]} : vector<8x128xf32> to vector<8x32xf32>
    %40 = vector.extract_strided_slice %38 {offsets = [0, 0], sizes = [8, 32], strides = [1, 1]} : vector<8x128xf32> to vector<8x32xf32>
    %41 = arith.addf %39, %40 : vector<8x32xf32>
    %42 = arith.negf %41 : vector<8x32xf32>
    %43 = math.exp %42 : vector<8x32xf32>
    %cst_14 = arith.constant 1.000000e+00 : f32
    %44 = vector.broadcast %cst_14 : f32 to vector<8x32xf32>
    %45 = arith.addf %44, %43 : vector<8x32xf32>
    %46 = arith.divf %44, %45 : vector<8x32xf32>
    %47 = vector.extract_strided_slice %37 {offsets = [0, 32], sizes = [8, 32], strides = [1, 1]} : vector<8x128xf32> to vector<8x32xf32>
    %48 = vector.extract_strided_slice %38 {offsets = [0, 32], sizes = [8, 32], strides = [1, 1]} : vector<8x128xf32> to vector<8x32xf32>
    %49 = arith.addf %47, %48 : vector<8x32xf32>
    %50 = arith.negf %49 : vector<8x32xf32>
    %51 = math.exp %50 : vector<8x32xf32>
    %cst_15 = arith.constant 1.000000e+00 : f32
    %52 = vector.broadcast %cst_15 : f32 to vector<8x32xf32>
    %53 = arith.addf %52, %51 : vector<8x32xf32>
    %54 = arith.divf %52, %53 : vector<8x32xf32>
    %55 = vector.extract_strided_slice %37 {offsets = [0, 64], sizes = [8, 32], strides = [1, 1]} : vector<8x128xf32> to vector<8x32xf32>
    %56 = vector.extract_strided_slice %38 {offsets = [0, 64], sizes = [8, 32], strides = [1, 1]} : vector<8x128xf32> to vector<8x32xf32>
    %57 = vector.broadcast %34 : vector<1x32xf32> to vector<8x32xf32>
    %58 = arith.addf %56, %57 : vector<8x32xf32>
    %59 = arith.mulf %46, %58 : vector<8x32xf32>
    %60 = arith.addf %55, %59 : vector<8x32xf32>
    %61 = math.tanh %60 : vector<8x32xf32>
    %cst_16 = arith.constant 1.000000e+00 : f32
    %62 = vector.broadcast %cst_16 : f32 to vector<8x32xf32>
    %63 = arith.subf %62, %54 : vector<8x32xf32>
    %64 = arith.mulf %63, %61 : vector<8x32xf32>
    %65 = arith.mulf %54, %35 : vector<8x32xf32>
    %66 = arith.addf %64, %65 : vector<8x32xf32>
    %67 = vector.extract_strided_slice %32 {offsets = [0, 1, 0], sizes = [8, 1, 128], strides = [1, 1, 1]} : vector<8x4x128xf32> to vector<8x1x128xf32>
    %68 = vector.shape_cast %67 : vector<8x1x128xf32> to vector<8x128xf32>
    %cst_17 = arith.constant dense<0.000000e+00> : vector<8x128xf32>
    %69 = tpu.matmul %66, %33, %cst_17 {dimension_numbers = #tpu.dot_dimension_numbers<[1], [0], [0], [1], [0, 0, 1, 1], [], []>} : vector<8x32xf32>, vector<32x128xf32>, vector<8x128xf32> -> vector<8x128xf32>
    %70 = vector.extract_strided_slice %68 {offsets = [0, 0], sizes = [8, 32], strides = [1, 1]} : vector<8x128xf32> to vector<8x32xf32>
    %71 = vector.extract_strided_slice %69 {offsets = [0, 0], sizes = [8, 32], strides = [1, 1]} : vector<8x128xf32> to vector<8x32xf32>
    %72 = arith.addf %70, %71 : vector<8x32xf32>
    %73 = arith.negf %72 : vector<8x32xf32>
    %74 = math.exp %73 : vector<8x32xf32>
    %cst_18 = arith.constant 1.000000e+00 : f32
    %75 = vector.broadcast %cst_18 : f32 to vector<8x32xf32>
    %76 = arith.addf %75, %74 : vector<8x32xf32>
    %77 = arith.divf %75, %76 : vector<8x32xf32>
    %78 = vector.extract_strided_slice %68 {offsets = [0, 32], sizes = [8, 32], strides = [1, 1]} : vector<8x128xf32> to vector<8x32xf32>
    %79 = vector.extract_strided_slice %69 {offsets = [0, 32], sizes = [8, 32], strides = [1, 1]} : vector<8x128xf32> to vector<8x32xf32>
    %80 = arith.addf %78, %79 : vector<8x32xf32>
    %81 = arith.negf %80 : vector<8x32xf32>
    %82 = math.exp %81 : vector<8x32xf32>
    %cst_19 = arith.constant 1.000000e+00 : f32
    %83 = vector.broadcast %cst_19 : f32 to vector<8x32xf32>
    %84 = arith.addf %83, %82 : vector<8x32xf32>
    %85 = arith.divf %83, %84 : vector<8x32xf32>
    %86 = vector.extract_strided_slice %68 {offsets = [0, 64], sizes = [8, 32], strides = [1, 1]} : vector<8x128xf32> to vector<8x32xf32>
    %87 = vector.extract_strided_slice %69 {offsets = [0, 64], sizes = [8, 32], strides = [1, 1]} : vector<8x128xf32> to vector<8x32xf32>
    %88 = vector.broadcast %34 : vector<1x32xf32> to vector<8x32xf32>
    %89 = arith.addf %87, %88 : vector<8x32xf32>
    %90 = arith.mulf %77, %89 : vector<8x32xf32>
    %91 = arith.addf %86, %90 : vector<8x32xf32>
    %92 = math.tanh %91 : vector<8x32xf32>
    %cst_20 = arith.constant 1.000000e+00 : f32
    %93 = vector.broadcast %cst_20 : f32 to vector<8x32xf32>
    %94 = arith.subf %93, %85 : vector<8x32xf32>
    %95 = arith.mulf %94, %92 : vector<8x32xf32>
    %96 = arith.mulf %85, %66 : vector<8x32xf32>
    %97 = arith.addf %95, %96 : vector<8x32xf32>
    %98 = vector.extract_strided_slice %32 {offsets = [0, 2, 0], sizes = [8, 1, 128], strides = [1, 1, 1]} : vector<8x4x128xf32> to vector<8x1x128xf32>
    %99 = vector.shape_cast %98 : vector<8x1x128xf32> to vector<8x128xf32>
    %cst_21 = arith.constant dense<0.000000e+00> : vector<8x128xf32>
    %100 = tpu.matmul %97, %33, %cst_21 {dimension_numbers = #tpu.dot_dimension_numbers<[1], [0], [0], [1], [0, 0, 1, 1], [], []>} : vector<8x32xf32>, vector<32x128xf32>, vector<8x128xf32> -> vector<8x128xf32>
    %101 = vector.extract_strided_slice %99 {offsets = [0, 0], sizes = [8, 32], strides = [1, 1]} : vector<8x128xf32> to vector<8x32xf32>
    %102 = vector.extract_strided_slice %100 {offsets = [0, 0], sizes = [8, 32], strides = [1, 1]} : vector<8x128xf32> to vector<8x32xf32>
    %103 = arith.addf %101, %102 : vector<8x32xf32>
    %104 = arith.negf %103 : vector<8x32xf32>
    %105 = math.exp %104 : vector<8x32xf32>
    %cst_22 = arith.constant 1.000000e+00 : f32
    %106 = vector.broadcast %cst_22 : f32 to vector<8x32xf32>
    %107 = arith.addf %106, %105 : vector<8x32xf32>
    %108 = arith.divf %106, %107 : vector<8x32xf32>
    %109 = vector.extract_strided_slice %99 {offsets = [0, 32], sizes = [8, 32], strides = [1, 1]} : vector<8x128xf32> to vector<8x32xf32>
    %110 = vector.extract_strided_slice %100 {offsets = [0, 32], sizes = [8, 32], strides = [1, 1]} : vector<8x128xf32> to vector<8x32xf32>
    %111 = arith.addf %109, %110 : vector<8x32xf32>
    %112 = arith.negf %111 : vector<8x32xf32>
    %113 = math.exp %112 : vector<8x32xf32>
    %cst_23 = arith.constant 1.000000e+00 : f32
    %114 = vector.broadcast %cst_23 : f32 to vector<8x32xf32>
    %115 = arith.addf %114, %113 : vector<8x32xf32>
    %116 = arith.divf %114, %115 : vector<8x32xf32>
    %117 = vector.extract_strided_slice %99 {offsets = [0, 64], sizes = [8, 32], strides = [1, 1]} : vector<8x128xf32> to vector<8x32xf32>
    %118 = vector.extract_strided_slice %100 {offsets = [0, 64], sizes = [8, 32], strides = [1, 1]} : vector<8x128xf32> to vector<8x32xf32>
    %119 = vector.broadcast %34 : vector<1x32xf32> to vector<8x32xf32>
    %120 = arith.addf %118, %119 : vector<8x32xf32>
    %121 = arith.mulf %108, %120 : vector<8x32xf32>
    %122 = arith.addf %117, %121 : vector<8x32xf32>
    %123 = math.tanh %122 : vector<8x32xf32>
    %cst_24 = arith.constant 1.000000e+00 : f32
    %124 = vector.broadcast %cst_24 : f32 to vector<8x32xf32>
    %125 = arith.subf %124, %116 : vector<8x32xf32>
    %126 = arith.mulf %125, %123 : vector<8x32xf32>
    %127 = arith.mulf %116, %97 : vector<8x32xf32>
    %128 = arith.addf %126, %127 : vector<8x32xf32>
    %129 = vector.extract_strided_slice %32 {offsets = [0, 3, 0], sizes = [8, 1, 128], strides = [1, 1, 1]} : vector<8x4x128xf32> to vector<8x1x128xf32>
    %130 = vector.shape_cast %129 : vector<8x1x128xf32> to vector<8x128xf32>
    %cst_25 = arith.constant dense<0.000000e+00> : vector<8x128xf32>
    %131 = tpu.matmul %128, %33, %cst_25 {dimension_numbers = #tpu.dot_dimension_numbers<[1], [0], [0], [1], [0, 0, 1, 1], [], []>} : vector<8x32xf32>, vector<32x128xf32>, vector<8x128xf32> -> vector<8x128xf32>
    %132 = vector.extract_strided_slice %130 {offsets = [0, 0], sizes = [8, 32], strides = [1, 1]} : vector<8x128xf32> to vector<8x32xf32>
    %133 = vector.extract_strided_slice %131 {offsets = [0, 0], sizes = [8, 32], strides = [1, 1]} : vector<8x128xf32> to vector<8x32xf32>
    %134 = arith.addf %132, %133 : vector<8x32xf32>
    %135 = arith.negf %134 : vector<8x32xf32>
    %136 = math.exp %135 : vector<8x32xf32>
    %cst_26 = arith.constant 1.000000e+00 : f32
    %137 = vector.broadcast %cst_26 : f32 to vector<8x32xf32>
    %138 = arith.addf %137, %136 : vector<8x32xf32>
    %139 = arith.divf %137, %138 : vector<8x32xf32>
    %140 = vector.extract_strided_slice %130 {offsets = [0, 32], sizes = [8, 32], strides = [1, 1]} : vector<8x128xf32> to vector<8x32xf32>
    %141 = vector.extract_strided_slice %131 {offsets = [0, 32], sizes = [8, 32], strides = [1, 1]} : vector<8x128xf32> to vector<8x32xf32>
    %142 = arith.addf %140, %141 : vector<8x32xf32>
    %143 = arith.negf %142 : vector<8x32xf32>
    %144 = math.exp %143 : vector<8x32xf32>
    %cst_27 = arith.constant 1.000000e+00 : f32
    %145 = vector.broadcast %cst_27 : f32 to vector<8x32xf32>
    %146 = arith.addf %145, %144 : vector<8x32xf32>
    %147 = arith.divf %145, %146 : vector<8x32xf32>
    %148 = vector.extract_strided_slice %130 {offsets = [0, 64], sizes = [8, 32], strides = [1, 1]} : vector<8x128xf32> to vector<8x32xf32>
    %149 = vector.extract_strided_slice %131 {offsets = [0, 64], sizes = [8, 32], strides = [1, 1]} : vector<8x128xf32> to vector<8x32xf32>
    %150 = vector.broadcast %34 : vector<1x32xf32> to vector<8x32xf32>
    %151 = arith.addf %149, %150 : vector<8x32xf32>
    %152 = arith.mulf %139, %151 : vector<8x32xf32>
    %153 = arith.addf %148, %152 : vector<8x32xf32>
    %154 = math.tanh %153 : vector<8x32xf32>
    %cst_28 = arith.constant 1.000000e+00 : f32
    %155 = vector.broadcast %cst_28 : f32 to vector<8x32xf32>
    %156 = arith.subf %155, %147 : vector<8x32xf32>
    %157 = arith.mulf %156, %154 : vector<8x32xf32>
    %158 = arith.mulf %147, %128 : vector<8x32xf32>
    %159 = arith.addf %157, %158 : vector<8x32xf32>
    %c128 = arith.constant 128 : index
    %c0_29 = arith.constant 0 : index
    %160 = vector.load %arg2[%c128, %c0_29] : memref<320x128xf32, #tpu.memory_space<vmem>>, vector<32x128xf32>
    %cst_30 = arith.constant dense<0.000000e+00> : vector<8x128xf32>
    %161 = tpu.matmul %159, %160, %cst_30 {dimension_numbers = #tpu.dot_dimension_numbers<[1], [0], [0], [1], [0, 0, 1, 1], [], []>} : vector<8x32xf32>, vector<32x128xf32>, vector<8x128xf32> -> vector<8x128xf32>
    %162 = vector.extract_strided_slice %0 {offsets = [4, 0], sizes = [1, 128], strides = [1, 1]} : vector<8x128xf32> to vector<1x128xf32>
    %163 = vector.broadcast %162 : vector<1x128xf32> to vector<8x128xf32>
    %164 = arith.addf %161, %163 : vector<8x128xf32>
    %cst_31 = arith.constant 0.000000e+00 : f32
    %165 = vector.broadcast %cst_31 : f32 to vector<8x128xf32>
    %166 = arith.maximumf %164, %165 : vector<8x128xf32>
    %c160 = arith.constant 160 : index
    %c0_32 = arith.constant 0 : index
    %167 = vector.load %arg2[%c160, %c0_32] : memref<320x128xf32, #tpu.memory_space<vmem>>, vector<128x128xf32>
    %cst_33 = arith.constant dense<0.000000e+00> : vector<8x128xf32>
    %168 = tpu.matmul %166, %167, %cst_33 {dimension_numbers = #tpu.dot_dimension_numbers<[1], [0], [0], [1], [0, 0, 1, 1], [], []>} : vector<8x128xf32>, vector<128x128xf32>, vector<8x128xf32> -> vector<8x128xf32>
    %c288 = arith.constant 288 : index
    %c0_34 = arith.constant 0 : index
    %169 = vector.load %arg2[%c288, %c0_34] : memref<320x128xf32, #tpu.memory_space<vmem>>, vector<32x128xf32>
    %cst_35 = arith.constant dense<0.000000e+00> : vector<8x128xf32>
    %170 = tpu.matmul %159, %169, %cst_35 {dimension_numbers = #tpu.dot_dimension_numbers<[1], [0], [0], [1], [0, 0, 1, 1], [], []>} : vector<8x32xf32>, vector<32x128xf32>, vector<8x128xf32> -> vector<8x128xf32>
    %171 = arith.addf %168, %170 : vector<8x128xf32>
    %172 = vector.extract_strided_slice %0 {offsets = [5, 0], sizes = [1, 128], strides = [1, 1]} : vector<8x128xf32> to vector<1x128xf32>
    %173 = vector.broadcast %172 : vector<1x128xf32> to vector<8x128xf32>
    %174 = arith.addf %171, %173 : vector<8x128xf32>
    %c0_36 = arith.constant 0 : index
    %c0_37 = arith.constant 0 : index
    %175 = vector.load %arg4[%c0_36, %c0_37] : memref<8x128xf32, #tpu.memory_space<vmem>>, vector<8x128xf32>
    tpu.vector_store %arg4[%c0_36, %c0_37], %174 {strides = array<i32>} : memref<8x128xf32, #tpu.memory_space<vmem>>, vector<8x128xf32>,
    return
  }
  func.func @transform_0(%arg0: i32) -> (i32, i32) {
    %c0_i32 = arith.constant 0 : i32
    %c0_i32_0 = arith.constant 0 : i32
    return %arg0, %c0_i32 : i32, i32
  }
  func.func @transform_1(%arg0: i32) -> (i32, i32) {
    %c0_i32 = arith.constant 0 : i32
    %c0_i32_0 = arith.constant 0 : i32
    %c0_i32_1 = arith.constant 0 : i32
    return %c0_i32, %c0_i32_0 : i32, i32
  }
  func.func @transform_2(%arg0: i32) -> (i32, i32) {
    %c0_i32 = arith.constant 0 : i32
    %c0_i32_0 = arith.constant 0 : i32
    %c0_i32_1 = arith.constant 0 : i32
    return %c0_i32, %c0_i32_0 : i32, i32
  }
  func.func @transform_3(%arg0: i32) -> (i32, i32) {
    %c0_i32 = arith.constant 0 : i32
    %c0_i32_0 = arith.constant 0 : i32
    return %arg0, %c0_i32 : i32, i32
  }
}

</mosaic_0001>

<llo_original>
// kernel: tile.13
$region0: #{tile.13}
  #allocation0 [shape = 's32[1]{0}', space=sflag, size = 0x4, scoped, tag = 'scoped memory for tile.13']
  %s0 = inlined_call_operand.vmem [shape: f32[8], index: 0, kind: input, shape index: {}]
  %s1 = inlined_call_operand.vmem [shape: f32[16,8], index: 1, kind: output, shape index: {}]
  // Predicated region
  $region2: #{tile.13} parent=0 // pred_check
    _
  $region3: #{tile.13} parent=0 // pred_check_branch
    %3 = sbr.rel (0) target = $region5
  $region4: #{tile.13} parent=0 // pred_region
    _
  $region5: #{tile.13} parent=0 // pred_fallthru
    _
  %v4 = vld [vmem:[%s0] ss:$0 sm:$0xff]
  %5 = vst [vmem:[%s1] sm:$0xff] %v4
  %s6 = scalar_lea.vmem %s1, 8
  %7 = vst [vmem:[%s6] sm:$0xff] %v4

// kernel: tile.18
$region0: #{tile.18}
  #allocation0 [shape = 's32[1]{0}', space=sflag, size = 0x4, scoped, tag = 'scoped memory for tile.18']
  %s0 = inlined_call_operand.vmem [shape: f32[16], index: 0, kind: input, shape index: {}]
  %s1 = inlined_call_operand.vmem [shape: f32[8,16], index: 1, kind: output, shape index: {}]
  // Predicated region
  $region2: #{tile.18} parent=0 // pred_check
    _
  $region3: #{tile.18} parent=0 // pred_check_branch
    %3 = sbr.rel (0) target = $region5
  $region4: #{tile.18} parent=0 // pred_region
    _
  $region5: #{tile.18} parent=0 // pred_fallthru
    _
  %v4 = vld [vmem:[%s0] ss:$0 sm:$0xff]
  %5 = vst [vmem:[%s1] sm:$0xff] %v4

// kernel: cnngru_forward.1
$region0: #{cnngru_forward.1}
  #allocation0 [shape = 'u32[]', space=smem, size = 0x4, offset = 0x4, fixed_abs, tag = 'smem constant byte address 0x4 - core index']
  #allocation1 [shape = 'u32[144,128]{1,0:T(1,128)}', space=vmem, size = 0x12000, scoped, tag = 'internal scratch']
  %s0 = inlined_call_operand.vmem [shape: f32[8,16], index: 0, kind: input, shape index: {}]
  %s1 = inlined_call_operand.vmem [shape: f32[320,128], index: 1, kind: input, shape index: {}]
  %s2 = inlined_call_operand.vmem [shape: f32[8,128], index: 2, kind: input, shape index: {}]
  %s3 = inlined_call_operand.vmem [shape: f32[8,128], index: 3, kind: output, shape index: {}]
  %s4 = sld [smem:[#allocation0]]
  $region22: #{cnngru_forward.1} parent=0
    _
  %s6 = ssub.s32 1, %s4
  %s7 = scalar_select 0, %s6, %s4
  // Predicated region
  $region2: #{cnngru_forward.1} parent=0 // pred_check
    _
  $region3: #{cnngru_forward.1} parent=0 // pred_check_branch
    %9 = sbr.rel (0) target = $region5
  $region4: #{cnngru_forward.1} parent=0 // pred_region
    _
  $region5: #{cnngru_forward.1} parent=0 // pred_fallthru
    _
  // Predicated region
  $region6: #{cnngru_forward.1} parent=0 // pred_check
    _
  $region7: #{cnngru_forward.1} parent=0 // pred_check_branch
    %11 = sbr.rel (0) target = $region9
  $region8: #{cnngru_forward.1} parent=0 // pred_region
    _
  $region9: #{cnngru_forward.1} parent=0 // pred_fallthru
    _
  // Predicated region
  $region10: #{cnngru_forward.1} parent=0 // pred_check
    _
  $region11: #{cnngru_forward.1} parent=0 // pred_check_branch
    %13 = sbr.rel (0) target = $region13
  $region12: #{cnngru_forward.1} parent=0 // pred_region
    _
  $region13: #{cnngru_forward.1} parent=0 // pred_fallthru
    _
  %v14 = vld [vmem:[%s2] sm:$0xff]
  %v15 = vld [vmem:[%s0] sm:$0xff]
  %v16 = vld [vmem:[%s1] sm:$0xff]
  %v17 = vld [vmem:[%s1 + $0x8] sm:$0xff]
  %v18 = vlaneseq
  %v19 = vshrl.u32 %v18, 7
  %v20 = vsub.s32 0, %v19
  %v21 = vrot.slane %v14, %v20
  %vm22 = vcmask 130048
  %v24 = vsel %vm22, %v15, 0
  %26 = vmatprep.subr.mxu0 0.0
  %27 = vmatpush1.msra.mxu0 0.0
  %28 = vmatprep.subr.mxu0 0.0
  %29 = vmatpush1.msra.mxu0 0.0
  %30 = vmatprep.subr.mxu0 0.0
  %31 = vmatpush1.msra.mxu0 0.0
  %32 = vmatprep.subr.mxu0 0.0
  %33 = vmatpush1.msra.mxu0 0.0
  %34 = vmatprep.subr.mxu0 0.0
  %35 = vmatpush1.msra.mxu0 0.0
  %36 = vmatprep.subr.mxu0 0.0
  %37 = vmatpush1.msra.mxu0 0.0
  %38 = vmatprep.subr.mxu0 0.0
  %39 = vmatpush1.msra.mxu0 0.0
  %40 = vmatprep.subr.mxu0 0.0
  %41 = vmatpush1.msra.mxu0 0.0
  %42 = vmatprep.subr.mxu0 0.0
  %43 = vmatpush1.msra.mxu0 0.0
  %44 = vmatprep.subr.mxu0 0.0
  %45 = vmatpush1.msra.mxu0 0.0
  %46 = vmatprep.subr.mxu0 0.0
  %47 = vmatpush1.msra.mxu0 0.0
  %48 = vmatprep.subr.mxu0 0.0
  %49 = vmatpush1.msra.mxu0 0.0
  %50 = vmatprep.subr.mxu0 0.0
  %51 = vmatpush1.msra.mxu0 0.0
  %52 = vmatprep.subr.mxu0 0.0
  %53 = vmatpush1.msra.mxu0 0.0
  %54 = vmatprep.subr.mxu0 0.0
  %55 = vmatpush1.msra.mxu0 %v17
  %56 = vmatprep.subr.mxu0 0.0
  %57 = vmatpush1.msra.mxu0 %v16
  %58 = vmatprep.subr.mxu0 0.0
  %59 = vmatpush2.msra.mxu0 0.0
  %60 = vmatprep.subr.mxu0 0.0
  %61 = vmatpush2.msra.mxu0 0.0
  %62 = vmatprep.subr.mxu0 0.0
  %63 = vmatpush2.msra.mxu0 0.0
  %64 = vmatprep.subr.mxu0 0.0
  %65 = vmatpush2.msra.mxu0 0.0
  %66 = vmatprep.subr.mxu0 0.0
  %67 = vmatpush2.msra.mxu0 0.0
  %68 = vmatprep.subr.mxu0 0.0
  %69 = vmatpush2.msra.mxu0 0.0
  %70 = vmatprep.subr.mxu0 0.0
  %71 = vmatpush2.msra.mxu0 0.0
  %72 = vmatprep.subr.mxu0 0.0
  %73 = vmatpush2.msra.mxu0 0.0
  %74 = vmatprep.subr.mxu0 0.0
  %75 = vmatpush2.msra.mxu0 0.0
  %76 = vmatprep.subr.mxu0 0.0
  %77 = vmatpush2.msra.mxu0 0.0
  %78 = vmatprep.subr.mxu0 0.0
  %79 = vmatpush2.msra.mxu0 0.0
  %80 = vmatprep.subr.mxu0 0.0
  %81 = vmatpush2.msra.mxu0 0.0
  %82 = vmatprep.subr.mxu0 0.0
  %83 = vmatpush2.msra.mxu0 0.0
  %84 = vmatprep.subr.mxu0 0.0
  %85 = vmatpush2.msra.mxu0 0.0
  %86 = vmatprep.subr.mxu0 0.0
  %87 = vmatpush2.msra.mxu0 0.0
  %88 = vmatprep.subr.mxu0 0.0
  %89 = vmatpush2.msra.mxu0 0.0
  %90 = vmatprep.mubr.f32.mxu0 0.0
  %91 = vmatmul.mubr.f32.gmra.mxu0 %v24
  %v92 = vpop.f32.mrf.mxu0
  %v93 = vadd.f32 %v21, %v92
  %v94 = vpop.f32.mrf.mxu0
  %95 = vdwg.mxu0
  %v96 = vmax.f32 %v93, 0.0
  %98 = vrot.lane.b32.xlu0 %v96, 112
  %v99 = vpop.permute.xlu0 %98
  %101 = vrot.lane.b32.xlu0 %v96, 96
  %v102 = vpop.permute.xlu0 %101
  %104 = vrot.lane.b32.xlu0 %v96, 80
  %v105 = vpop.permute.xlu0 %104
  %107 = vrot.lane.b32.xlu0 %v96, 64
  %v108 = vpop.permute.xlu0 %107
  %110 = vrot.lane.b32.xlu0 %v96, 48
  %v111 = vpop.permute.xlu0 %110
  %113 = vrot.lane.b32.xlu0 %v96, 32
  %v114 = vpop.permute.xlu0 %113
  %116 = vrot.lane.b32.xlu0 %v96, 16
  %v117 = vpop.permute.xlu0 %116
  %v119 = vcombine.low %v96, %v102
  %v120 = vcombine.high %v96, %v102
  %v122 = vunpack.c.l.s4 1983009808
  %v123 = vunpack.c.0.s8 %v122
  %v124 = vlaneseq
  %v125 = vshrl.u32 %v124, 7
  %v126 = vsub.s32 %v123, %v125
  %v127 = vrot.slane %v119, %v126
  %v129 = vunpack.c.l.s4 1983009808
  %v130 = vunpack.c.0.s8 %v129
  %v131 = vlaneseq
  %v132 = vshrl.u32 %v131, 7
  %v133 = vsub.s32 %v130, %v132
  %v134 = vrot.slane %v120, %v133
  %v135 = vcombine.low %v99, %v105
  %v136 = vcombine.high %v99, %v105
  %v138 = vunpack.c.l.s4 1983009808
  %v139 = vunpack.c.0.s8 %v138
  %v140 = vlaneseq
  %v141 = vshrl.u32 %v140, 7
  %v142 = vsub.s32 %v139, %v141
  %v143 = vrot.slane %v135, %v142
  %v145 = vunpack.c.l.s4 1983009808
  %v146 = vunpack.c.0.s8 %v145
  %v147 = vlaneseq
  %v148 = vshrl.u32 %v147, 7
  %v149 = vsub.s32 %v146, %v148
  %v150 = vrot.slane %v136, %v149
  %v151 = vcombine.low %v108, %v114
  %v152 = vcombine.high %v108, %v114
  %v154 = vunpack.c.l.s4 1983009808
  %v155 = vunpack.c.0.s8 %v154
  %v156 = vlaneseq
  %v157 = vshrl.u32 %v156, 7
  %v158 = vsub.s32 %v155, %v157
  %v159 = vrot.slane %v151, %v158
  %v161 = vunpack.c.l.s4 1983009808
  %v162 = vunpack.c.0.s8 %v161
  %v163 = vlaneseq
  %v164 = vshrl.u32 %v163, 7
  %v165 = vsub.s32 %v162, %v164
  %v166 = vrot.slane %v152, %v165
  %v167 = vcombine.low %v111, %v117
  %v168 = vcombine.high %v111, %v117
  %v170 = vunpack.c.l.s4 1983009808
  %v171 = vunpack.c.0.s8 %v170
  %v172 = vlaneseq
  %v173 = vshrl.u32 %v172, 7
  %v174 = vsub.s32 %v171, %v173
  %v175 = vrot.slane %v167, %v174
  %v177 = vunpack.c.l.s4 1983009808
  %v178 = vunpack.c.0.s8 %v177
  %v179 = vlaneseq
  %v180 = vshrl.u32 %v179, 7
  %v181 = vsub.s32 %v178, %v180
  %v182 = vrot.slane %v168, %v181
  %v183 = vcombine.low %v127, %v143
  %v184 = vcombine.high %v127, %v143
  %v186 = vunpack.c.l.s4 1934713408
  %v187 = vunpack.c.0.s8 %v186
  %v188 = vlaneseq
  %v189 = vshrl.u32 %v188, 7
  %v190 = vsub.s32 %v187, %v189
  %v191 = vrot.slane %v183, %v190
  %v193 = vunpack.c.l.s4 1934713408
  %v194 = vunpack.c.0.s8 %v193
  %v195 = vlaneseq
  %v196 = vshrl.u32 %v195, 7
  %v197 = vsub.s32 %v194, %v196
  %v198 = vrot.slane %v184, %v197
  %v199 = vcombine.low %v134, %v150
  %v200 = vcombine.high %v134, %v150
  %v202 = vunpack.c.l.s4 1934713408
  %v203 = vunpack.c.0.s8 %v202
  %v204 = vlaneseq
  %v205 = vshrl.u32 %v204, 7
  %v206 = vsub.s32 %v203, %v205
  %v207 = vrot.slane %v199, %v206
  %v209 = vunpack.c.l.s4 1934713408
  %v210 = vunpack.c.0.s8 %v209
  %v211 = vlaneseq
  %v212 = vshrl.u32 %v211, 7
  %v213 = vsub.s32 %v210, %v212
  %v214 = vrot.slane %v200, %v213
  %v215 = vcombine.low %v159, %v175
  %v216 = vcombine.high %v159, %v175
  %v218 = vunpack.c.l.s4 1934713408
  %v219 = vunpack.c.0.s8 %v218
  %v220 = vlaneseq
  %v221 = vshrl.u32 %v220, 7
  %v222 = vsub.s32 %v219, %v221
  %v223 = vrot.slane %v215, %v222
  %v225 = vunpack.c.l.s4 1934713408
  %v226 = vunpack.c.0.s8 %v225
  %v227 = vlaneseq
  %v228 = vshrl.u32 %v227, 7
  %v229 = vsub.s32 %v226, %v228
  %v230 = vrot.slane %v216, %v229
  %v231 = vcombine.low %v166, %v182
  %v232 = vcombine.high %v166, %v182
  %v234 = vunpack.c.l.s4 1934713408
  %v235 = vunpack.c.0.s8 %v234
  %v236 = vlaneseq
  %v237 = vshrl.u32 %v236, 7
  %v238 = vsub.s32 %v235, %v237
  %v239 = vrot.slane %v231, %v238
  %v241 = vunpack.c.l.s4 1934713408
  %v242 = vunpack.c.0.s8 %v241
  %v243 = vlaneseq
  %v244 = vshrl.u32 %v243, 7
  %v245 = vsub.s32 %v242, %v244
  %v246 = vrot.slane %v232, %v245
  %v247 = vcombine.low %v191, %v223
  %v248 = vcombine.high %v191, %v223
  %v249 = vcombine.low %v198, %v230
  %v250 = vcombine.high %v198, %v230
  %v251 = vcombine.low %v207, %v239
  %v252 = vcombine.high %v207, %v239
  %v253 = vcombine.low %v214, %v246
  %v254 = vcombine.high %v214, %v246
  %263 = vrot.lane.b32.xlu0 %v247, 120
  %v264 = vpop.permute.xlu0 %263
  %265 = vrot.lane.b32.xlu0 %v248, 120
  %v266 = vpop.permute.xlu0 %265
  %267 = vrot.lane.b32.xlu0 %v249, 120
  %v268 = vpop.permute.xlu0 %267
  %269 = vrot.lane.b32.xlu0 %v250, 120
  %v270 = vpop.permute.xlu0 %269
  %271 = vrot.lane.b32.xlu0 %v251, 120
  %v272 = vpop.permute.xlu0 %271
  %273 = vrot.lane.b32.xlu0 %v252, 120
  %v274 = vpop.permute.xlu0 %273
  %275 = vrot.lane.b32.xlu0 %v253, 120
  %v276 = vpop.permute.xlu0 %275
  %277 = vrot.lane.b32.xlu0 %v254, 120
  %v278 = vpop.permute.xlu0 %277
  %v287 = vmax.f32 %v247, %v264
  %v288 = vmax.f32 %v248, %v266
  %v289 = vmax.f32 %v249, %v268
  %v290 = vmax.f32 %v250, %v270
  %v291 = vmax.f32 %v251, %v272
  %v292 = vmax.f32 %v252, %v274
  %v293 = vmax.f32 %v253, %v276
  %v294 = vmax.f32 %v254, %v278
  %v295 = vcombine.low %v287, %v289
  %v296 = vcombine.high %v287, %v289
  %v298 = vunpack.c.l.s4 1983009808
  %v299 = vunpack.c.0.s8 %v298
  %v300 = vlaneseq
  %v301 = vshrl.u32 %v300, 7
  %v302 = vsub.s32 %v299, %v301
  %v303 = vrot.slane %v295, %v302
  %v305 = vunpack.c.l.s4 1983009808
  %v306 = vunpack.c.0.s8 %v305
  %v307 = vlaneseq
  %v308 = vshrl.u32 %v307, 7
  %v309 = vsub.s32 %v306, %v308
  %v310 = vrot.slane %v296, %v309
  %v311 = vcombine.low %v288, %v290
  %v312 = vcombine.high %v288, %v290
  %v314 = vunpack.c.l.s4 1983009808
  %v315 = vunpack.c.0.s8 %v314
  %v316 = vlaneseq
  %v317 = vshrl.u32 %v316, 7
  %v318 = vsub.s32 %v315, %v317
  %v319 = vrot.slane %v311, %v318
  %v321 = vunpack.c.l.s4 1983009808
  %v322 = vunpack.c.0.s8 %v321
  %v323 = vlaneseq
  %v324 = vshrl.u32 %v323, 7
  %v325 = vsub.s32 %v322, %v324
  %v326 = vrot.slane %v312, %v325
  %v327 = vcombine.low %v291, %v293
  %v328 = vcombine.high %v291, %v293
  %v330 = vunpack.c.l.s4 1983009808
  %v331 = vunpack.c.0.s8 %v330
  %v332 = vlaneseq
  %v333 = vshrl.u32 %v332, 7
  %v334 = vsub.s32 %v331, %v333
  %v335 = vrot.slane %v327, %v334
  %v337 = vunpack.c.l.s4 1983009808
  %v338 = vunpack.c.0.s8 %v337
  %v339 = vlaneseq
  %v340 = vshrl.u32 %v339, 7
  %v341 = vsub.s32 %v338, %v340
  %v342 = vrot.slane %v328, %v341
  %v343 = vcombine.low %v292, %v294
  %v344 = vcombine.high %v292, %v294
  %v346 = vunpack.c.l.s4 1983009808
  %v347 = vunpack.c.0.s8 %v346
  %v348 = vlaneseq
  %v349 = vshrl.u32 %v348, 7
  %v350 = vsub.s32 %v347, %v349
  %v351 = vrot.slane %v343, %v350
  %v353 = vunpack.c.l.s4 1983009808
  %v354 = vunpack.c.0.s8 %v353
  %v355 = vlaneseq
  %v356 = vshrl.u32 %v355, 7
  %v357 = vsub.s32 %v354, %v356
  %v358 = vrot.slane %v344, %v357
  %v359 = vcombine.low %v303, %v319
  %v360 = vcombine.high %v303, %v319
  %v362 = vunpack.c.l.s4 1934713408
  %v363 = vunpack.c.0.s8 %v362
  %v364 = vlaneseq
  %v365 = vshrl.u32 %v364, 7
  %v366 = vsub.s32 %v363, %v365
  %v367 = vrot.slane %v359, %v366
  %v369 = vunpack.c.l.s4 1934713408
  %v370 = vunpack.c.0.s8 %v369
  %v371 = vlaneseq
  %v372 = vshrl.u32 %v371, 7
  %v373 = vsub.s32 %v370, %v372
  %v374 = vrot.slane %v360, %v373
  %v375 = vcombine.low %v310, %v326
  %v376 = vcombine.high %v310, %v326
  %v378 = vunpack.c.l.s4 1934713408
  %v379 = vunpack.c.0.s8 %v378
  %v380 = vlaneseq
  %v381 = vshrl.u32 %v380, 7
  %v382 = vsub.s32 %v379, %v381
  %v383 = vrot.slane %v375, %v382
  %v385 = vunpack.c.l.s4 1934713408
  %v386 = vunpack.c.0.s8 %v385
  %v387 = vlaneseq
  %v388 = vshrl.u32 %v387, 7
  %v389 = vsub.s32 %v386, %v388
  %v390 = vrot.slane %v376, %v389
  %v391 = vcombine.low %v335, %v351
  %v392 = vcombine.high %v335, %v351
  %v394 = vunpack.c.l.s4 1934713408
  %v395 = vunpack.c.0.s8 %v394
  %v396 = vlaneseq
  %v397 = vshrl.u32 %v396, 7
  %v398 = vsub.s32 %v395, %v397
  %v399 = vrot.slane %v391, %v398
  %v401 = vunpack.c.l.s4 1934713408
  %v402 = vunpack.c.0.s8 %v401
  %v403 = vlaneseq
  %v404 = vshrl.u32 %v403, 7
  %v405 = vsub.s32 %v402, %v404
  %v406 = vrot.slane %v392, %v405
  %v407 = vcombine.low %v342, %v358
  %v408 = vcombine.high %v342, %v358
  %v410 = vunpack.c.l.s4 1934713408
  %v411 = vunpack.c.0.s8 %v410
  %v412 = vlaneseq
  %v413 = vshrl.u32 %v412, 7
  %v414 = vsub.s32 %v411, %v413
  %v415 = vrot.slane %v407, %v414
  %v417 = vunpack.c.l.s4 1934713408
  %v418 = vunpack.c.0.s8 %v417
  %v419 = vlaneseq
  %v420 = vshrl.u32 %v419, 7
  %v421 = vsub.s32 %v418, %v420
  %v422 = vrot.slane %v408, %v421
  %v423 = vcombine.low %v367, %v399
  %v424 = vcombine.high %v367, %v399
  %v425 = vcombine.low %v374, %v406
  %v426 = vcombine.high %v374, %v406
  %v427 = vcombine.low %v383, %v415
  %v428 = vcombine.high %v383, %v415
  %v429 = vcombine.low %v390, %v422
  %v430 = vcombine.high %v390, %v422
  %432 = vrot.lane.b32.xlu0 %v424, 8
  %v433 = vpop.permute.xlu0 %432
  %436 = vrot.lane.b32.xlu0 %v425, 16
  %v437 = vpop.permute.xlu0 %436
  %440 = vrot.lane.b32.xlu0 %v426, 24
  %v441 = vpop.permute.xlu0 %440
  %444 = vrot.lane.b32.xlu0 %v427, 32
  %v445 = vpop.permute.xlu0 %444
  %448 = vrot.lane.b32.xlu0 %v428, 40
  %v449 = vpop.permute.xlu0 %448
  %452 = vrot.lane.b32.xlu0 %v429, 48
  %v453 = vpop.permute.xlu0 %452
  %456 = vrot.lane.b32.xlu0 %v430, 56
  %v457 = vpop.permute.xlu0 %456
  %vm459 = vcmask 64512
  %v460 = vsel %vm459, %v423, %v433
  %v461 = vsel %vm22, %v460, %v437
  %vm462 = vcmask 195584
  %v463 = vsel %vm462, %v461, %v441
  %vm464 = vcmask 261120
  %v465 = vsel %vm464, %v463, %v445
  %vm466 = vcmask 326656
  %v467 = vsel %vm466, %v465, %v449
  %vm468 = vcmask 392192
  %v469 = vsel %vm468, %v467, %v453
  %vm470 = vcmask 457728
  %v471 = vsel %vm470, %v469, %v457
  %v472 = vld [vmem:[%s1 + $0x10] sm:$0xff]
  %v473 = vld [vmem:[%s1 + $0x18] sm:$0xff]
  %v474 = vld [vmem:[%s1 + $0x20] sm:$0xff]
  %v475 = vld [vmem:[%s1 + $0x28] sm:$0xff]
  %v476 = vld [vmem:[%s1 + $0x30] sm:$0xff]
  %v477 = vld [vmem:[%s1 + $0x38] sm:$0xff]
  %v478 = vld [vmem:[%s1 + $0x40] sm:$0xff]
  %v479 = vld [vmem:[%s1 + $0x48] sm:$0xff]
  %v480 = vlaneseq
  %v481 = vshrl.u32 %v480, 7
  %v482 = vsub.s32 1, %v481
  %v483 = vrot.slane %v14, %v482
  %vm484 = vcmask 523264
  %v486 = vsel %vm484, %v471, 0
  %488 = vmatprep.subr.mxu0 0.0
  %489 = vmatpush1.msra.mxu0 0.0
  %490 = vmatprep.subr.mxu0 0.0
  %491 = vmatpush1.msra.mxu0 0.0
  %492 = vmatprep.subr.mxu0 0.0
  %493 = vmatpush1.msra.mxu0 0.0
  %494 = vmatprep.subr.mxu0 0.0
  %495 = vmatpush1.msra.mxu0 0.0
  %496 = vmatprep.subr.mxu0 0.0
  %497 = vmatpush1.msra.mxu0 0.0
  %498 = vmatprep.subr.mxu0 0.0
  %499 = vmatpush1.msra.mxu0 0.0
  %500 = vmatprep.subr.mxu0 0.0
  %501 = vmatpush1.msra.mxu0 0.0
  %502 = vmatprep.subr.mxu0 0.0
  %503 = vmatpush1.msra.mxu0 0.0
  %504 = vmatprep.subr.mxu0 0.0
  %505 = vmatpush1.msra.mxu0 %v479
  %506 = vmatprep.subr.mxu0 0.0
  %507 = vmatpush1.msra.mxu0 %v478
  %508 = vmatprep.subr.mxu0 0.0
  %509 = vmatpush1.msra.mxu0 %v477
  %510 = vmatprep.subr.mxu0 0.0
  %511 = vmatpush1.msra.mxu0 %v476
  %512 = vmatprep.subr.mxu0 0.0
  %513 = vmatpush1.msra.mxu0 %v475
  %514 = vmatprep.subr.mxu0 0.0
  %515 = vmatpush1.msra.mxu0 %v474
  %516 = vmatprep.subr.mxu0 0.0
  %517 = vmatpush1.msra.mxu0 %v473
  %518 = vmatprep.subr.mxu0 0.0
  %519 = vmatpush1.msra.mxu0 %v472
  %520 = vmatprep.subr.mxu0 0.0
  %521 = vmatpush2.msra.mxu0 0.0
  %522 = vmatprep.subr.mxu0 0.0
  %523 = vmatpush2.msra.mxu0 0.0
  %524 = vmatprep.subr.mxu0 0.0
  %525 = vmatpush2.msra.mxu0 0.0
  %526 = vmatprep.subr.mxu0 0.0
  %527 = vmatpush2.msra.mxu0 0.0
  %528 = vmatprep.subr.mxu0 0.0
  %529 = vmatpush2.msra.mxu0 0.0
  %530 = vmatprep.subr.mxu0 0.0
  %531 = vmatpush2.msra.mxu0 0.0
  %532 = vmatprep.subr.mxu0 0.0
  %533 = vmatpush2.msra.mxu0 0.0
  %534 = vmatprep.subr.mxu0 0.0
  %535 = vmatpush2.msra.mxu0 0.0
  %536 = vmatprep.subr.mxu0 0.0
  %537 = vmatpush2.msra.mxu0 0.0
  %538 = vmatprep.subr.mxu0 0.0
  %539 = vmatpush2.msra.mxu0 0.0
  %540 = vmatprep.subr.mxu0 0.0
  %541 = vmatpush2.msra.mxu0 0.0
  %542 = vmatprep.subr.mxu0 0.0
  %543 = vmatpush2.msra.mxu0 0.0
  %544 = vmatprep.subr.mxu0 0.0
  %545 = vmatpush2.msra.mxu0 0.0
  %546 = vmatprep.subr.mxu0 0.0
  %547 = vmatpush2.msra.mxu0 0.0
  %548 = vmatprep.subr.mxu0 0.0
  %549 = vmatpush2.msra.mxu0 0.0
  %550 = vmatprep.subr.mxu0 0.0
  %551 = vmatpush2.msra.mxu0 0.0
  %552 = vmatprep.mubr.f32.mxu0 0.0
  %553 = vmatmul.mubr.f32.gmra.mxu0 %v486
  %v554 = vpop.f32.mrf.mxu0
  %v555 = vadd.f32 %v483, %v554
  %v556 = vpop.f32.mrf.mxu0
  %557 = vdwg.mxu0
  %v558 = vmax.f32 %v555, 0.0
  %560 = vrot.lane.b32.xlu0 %v558, 96
  %v561 = vpop.permute.xlu0 %560
  %563 = vrot.lane.b32.xlu0 %v558, 64
  %v564 = vpop.permute.xlu0 %563
  %566 = vrot.lane.b32.xlu0 %v558, 32
  %v567 = vpop.permute.xlu0 %566
  %v569 = vcombine.low %v558, %v564
  %v570 = vcombine.high %v558, %v564
  %v572 = vunpack.c.l.s4 1983009808
  %v573 = vunpack.c.0.s8 %v572
  %v574 = vlaneseq
  %v575 = vshrl.u32 %v574, 7
  %v576 = vsub.s32 %v573, %v575
  %v577 = vrot.slane %v569, %v576
  %v579 = vunpack.c.l.s4 1983009808
  %v580 = vunpack.c.0.s8 %v579
  %v581 = vlaneseq
  %v582 = vshrl.u32 %v581, 7
  %v583 = vsub.s32 %v580, %v582
  %v584 = vrot.slane %v570, %v583
  %v585 = vcombine.low %v561, %v567
  %v586 = vcombine.high %v561, %v567
  %v588 = vunpack.c.l.s4 1983009808
  %v589 = vunpack.c.0.s8 %v588
  %v590 = vlaneseq
  %v591 = vshrl.u32 %v590, 7
  %v592 = vsub.s32 %v589, %v591
  %v593 = vrot.slane %v585, %v592
  %v595 = vunpack.c.l.s4 1983009808
  %v596 = vunpack.c.0.s8 %v595
  %v597 = vlaneseq
  %v598 = vshrl.u32 %v597, 7
  %v599 = vsub.s32 %v596, %v598
  %v600 = vrot.slane %v586, %v599
  %v601 = vcombine.low %v577, %v593
  %v602 = vcombine.high %v577, %v593
  %v604 = vunpack.c.l.s4 1934713408
  %v605 = vunpack.c.0.s8 %v604
  %v606 = vlaneseq
  %v607 = vshrl.u32 %v606, 7
  %v608 = vsub.s32 %v605, %v607
  %v609 = vrot.slane %v601, %v608
  %v611 = vunpack.c.l.s4 1934713408
  %v612 = vunpack.c.0.s8 %v611
  %v613 = vlaneseq
  %v614 = vshrl.u32 %v613, 7
  %v615 = vsub.s32 %v612, %v614
  %v616 = vrot.slane %v602, %v615
  %v617 = vcombine.low %v584, %v600
  %v618 = vcombine.high %v584, %v600
  %v620 = vunpack.c.l.s4 1934713408
  %v621 = vunpack.c.0.s8 %v620
  %v622 = vlaneseq
  %v623 = vshrl.u32 %v622, 7
  %v624 = vsub.s32 %v621, %v623
  %v625 = vrot.slane %v617, %v624
  %v627 = vunpack.c.l.s4 1934713408
  %v628 = vunpack.c.0.s8 %v627
  %v629 = vlaneseq
  %v630 = vshrl.u32 %v629, 7
  %v631 = vsub.s32 %v628, %v630
  %v632 = vrot.slane %v618, %v631
  %v633 = vcombine.high %v609, 0.0
  %v634 = vcombine.high %v616, 0.0
  %v635 = vcombine.high %v625, 0.0
  %v636 = vcombine.high %v632, 0.0
  %645 = vrot.lane.b32.xlu0 %v609, 112
  %v646 = vpop.permute.xlu0 %645
  %647 = vrot.lane.b32.xlu0 %v633, 112
  %v648 = vpop.permute.xlu0 %647
  %649 = vrot.lane.b32.xlu0 %v616, 112
  %v650 = vpop.permute.xlu0 %649
  %651 = vrot.lane.b32.xlu0 %v634, 112
  %v652 = vpop.permute.xlu0 %651
  %653 = vrot.lane.b32.xlu0 %v625, 112
  %v654 = vpop.permute.xlu0 %653
  %655 = vrot.lane.b32.xlu0 %v635, 112
  %v656 = vpop.permute.xlu0 %655
  %657 = vrot.lane.b32.xlu0 %v632, 112
  %v658 = vpop.permute.xlu0 %657
  %659 = vrot.lane.b32.xlu0 %v636, 112
  %v660 = vpop.permute.xlu0 %659
  %v669 = vmax.f32 %v609, %v646
  %v670 = vmax.f32 %v633, %v648
  %v671 = vmax.f32 %v616, %v650
  %v672 = vmax.f32 %v634, %v652
  %v673 = vmax.f32 %v625, %v654
  %v674 = vmax.f32 %v635, %v656
  %v675 = vmax.f32 %v632, %v658
  %v676 = vmax.f32 %v636, %v660
  %v677 = vld [vmem:[%s1 + $0x50] sm:$0xff]
  %v678 = vld [vmem:[%s1 + $0x58] sm:$0xff]
  %v687 = vcombine.low %v669, %v670
  %v688 = vcombine.low %v671, %v672
  %v689 = vcombine.low %v673, %v674
  %v690 = vcombine.low %v675, %v676
  %v691 = vsel %vm22, %v687, 0
  %v693 = vsel %vm22, %v688, 0
  %v695 = vsel %vm22, %v689, 0
  %v697 = vsel %vm22, %v690, 0
  %699 = vmatprep.subr.mxu0 0.0
  %700 = vmatpush1.msra.mxu0 0.0
  %701 = vmatprep.subr.mxu0 0.0
  %702 = vmatpush1.msra.mxu0 0.0
  %703 = vmatprep.subr.mxu0 0.0
  %704 = vmatpush1.msra.mxu0 0.0
  %705 = vmatprep.subr.mxu0 0.0
  %706 = vmatpush1.msra.mxu0 0.0
  %707 = vmatprep.subr.mxu0 0.0
  %708 = vmatpush1.msra.mxu0 0.0
  %709 = vmatprep.subr.mxu0 0.0
  %710 = vmatpush1.msra.mxu0 0.0
  %711 = vmatprep.subr.mxu0 0.0
  %712 = vmatpush1.msra.mxu0 0.0
  %713 = vmatprep.subr.mxu0 0.0
  %714 = vmatpush1.msra.mxu0 0.0
  %715 = vmatprep.subr.mxu0 0.0
  %716 = vmatpush1.msra.mxu0 0.0
  %717 = vmatprep.subr.mxu0 0.0
  %718 = vmatpush1.msra.mxu0 0.0
  %719 = vmatprep.subr.mxu0 0.0
  %720 = vmatpush1.msra.mxu0 0.0
  %721 = vmatprep.subr.mxu0 0.0
  %722 = vmatpush1.msra.mxu0 0.0
  %723 = vmatprep.subr.mxu0 0.0
  %724 = vmatpush1.msra.mxu0 0.0
  %725 = vmatprep.subr.mxu0 0.0
  %726 = vmatpush1.msra.mxu0 0.0
  %727 = vmatprep.subr.mxu0 0.0
  %728 = vmatpush1.msra.mxu0 %v678
  %729 = vmatprep.subr.mxu0 0.0
  %730 = vmatpush1.msra.mxu0 %v677
  %731 = vmatprep.subr.mxu0 0.0
  %732 = vmatpush2.msra.mxu0 0.0
  %733 = vmatprep.subr.mxu0 0.0
  %734 = vmatpush2.msra.mxu0 0.0
  %735 = vmatprep.subr.mxu0 0.0
  %736 = vmatpush2.msra.mxu0 0.0
  %737 = vmatprep.subr.mxu0 0.0
  %738 = vmatpush2.msra.mxu0 0.0
  %739 = vmatprep.subr.mxu0 0.0
  %740 = vmatpush2.msra.mxu0 0.0
  %741 = vmatprep.subr.mxu0 0.0
  %742 = vmatpush2.msra.mxu0 0.0
  %743 = vmatprep.subr.mxu0 0.0
  %744 = vmatpush2.msra.mxu0 0.0
  %745 = vmatprep.subr.mxu0 0.0
  %746 = vmatpush2.msra.mxu0 0.0
  %747 = vmatprep.subr.mxu0 0.0
  %748 = vmatpush2.msra.mxu0 0.0
  %749 = vmatprep.subr.mxu0 0.0
  %750 = vmatpush2.msra.mxu0 0.0
  %751 = vmatprep.subr.mxu0 0.0
  %752 = vmatpush2.msra.mxu0 0.0
  %753 = vmatprep.subr.mxu0 0.0
  %754 = vmatpush2.msra.mxu0 0.0
  %755 = vmatprep.subr.mxu0 0.0
  %756 = vmatpush2.msra.mxu0 0.0
  %757 = vmatprep.subr.mxu0 0.0
  %758 = vmatpush2.msra.mxu0 0.0
  %759 = vmatprep.subr.mxu0 0.0
  %760 = vmatpush2.msra.mxu0 0.0
  %761 = vmatprep.subr.mxu0 0.0
  %762 = vmatpush2.msra.mxu0 0.0
  %763 = vmatprep.mubr.f32.mxu0 0.0
  %764 = vmatmul.mubr.f32.gmra.mxu0 %v691
  %v765 = vpop.f32.mrf.mxu0
  %v766 = vadd.f32 0.0, %v765
  %v767 = vpop.f32.mrf.mxu0
  %768 = vmatprep.mubr.f32.mxu0 0.0
  %769 = vmatmul.mubr.f32.gmra.mxu0 %v693
  %v770 = vpop.f32.mrf.mxu0
  %v771 = vadd.f32 0.0, %v770
  %v772 = vpop.f32.mrf.mxu0
  %773 = vmatprep.mubr.f32.mxu0 0.0
  %774 = vmatmul.mubr.f32.gmra.mxu0 %v695
  %v775 = vpop.f32.mrf.mxu0
  %v776 = vadd.f32 0.0, %v775
  %v777 = vpop.f32.mrf.mxu0
  %778 = vmatprep.mubr.f32.mxu0 0.0
  %779 = vmatmul.mubr.f32.gmra.mxu0 %v697
  %v780 = vpop.f32.mrf.mxu0
  %v781 = vadd.f32 0.0, %v780
  %v782 = vpop.f32.mrf.mxu0
  %783 = vdwg.mxu0
  %v788 = vcombine.high %v766, %v766
  %v789 = vcombine.high %v771, %v771
  %v790 = vcombine.high %v776, %v776
  %v791 = vcombine.high %v781, %v781
  %v796 = vlaneseq
  %v797 = vshrl.u32 %v796, 7
  %v798 = vsub.s32 2, %v797
  %v799 = vrot.slane %v14, %v798
  %v800 = vadd.f32 %v766, %v799
  %v801 = vadd.f32 %v788, %v799
  %v802 = vadd.f32 %v771, %v799
  %v803 = vadd.f32 %v789, %v799
  %v804 = vadd.f32 %v776, %v799
  %v805 = vadd.f32 %v790, %v799
  %v806 = vadd.f32 %v781, %v799
  %v807 = vadd.f32 %v791, %v799
  %v808 = vld [vmem:[%s1 + $0x60] sm:$0xff]
  %v809 = vld [vmem:[%s1 + $0x68] sm:$0xff]
  %v810 = vld [vmem:[%s1 + $0x70] sm:$0xff]
  %v811 = vld [vmem:[%s1 + $0x78] sm:$0xff]
  %v813 = vsel %vm464, 0.0, 0
  %815 = vmatprep.subr.mxu0 0.0
  %816 = vmatpush1.msra.mxu0 0.0
  %817 = vmatprep.subr.mxu0 0.0
  %818 = vmatpush1.msra.mxu0 0.0
  %819 = vmatprep.subr.mxu0 0.0
  %820 = vmatpush1.msra.mxu0 0.0
  %821 = vmatprep.subr.mxu0 0.0
  %822 = vmatpush1.msra.mxu0 0.0
  %823 = vmatprep.subr.mxu0 0.0
  %824 = vmatpush1.msra.mxu0 0.0
  %825 = vmatprep.subr.mxu0 0.0
  %826 = vmatpush1.msra.mxu0 0.0
  %827 = vmatprep.subr.mxu0 0.0
  %828 = vmatpush1.msra.mxu0 0.0
  %829 = vmatprep.subr.mxu0 0.0
  %830 = vmatpush1.msra.mxu0 0.0
  %831 = vmatprep.subr.mxu0 0.0
  %832 = vmatpush1.msra.mxu0 0.0
  %833 = vmatprep.subr.mxu0 0.0
  %834 = vmatpush1.msra.mxu0 0.0
  %835 = vmatprep.subr.mxu0 0.0
  %836 = vmatpush1.msra.mxu0 0.0
  %837 = vmatprep.subr.mxu0 0.0
  %838 = vmatpush1.msra.mxu0 0.0
  %839 = vmatprep.subr.mxu0 0.0
  %840 = vmatpush1.msra.mxu0 %v811
  %841 = vmatprep.subr.mxu0 0.0
  %842 = vmatpush1.msra.mxu0 %v810
  %843 = vmatprep.subr.mxu0 0.0
  %844 = vmatpush1.msra.mxu0 %v809
  %845 = vmatprep.subr.mxu0 0.0
  %846 = vmatpush1.msra.mxu0 %v808
  %847 = vmatprep.subr.mxu0 0.0
  %848 = vmatpush2.msra.mxu0 0.0
  %849 = vmatprep.subr.mxu0 0.0
  %850 = vmatpush2.msra.mxu0 0.0
  %851 = vmatprep.subr.mxu0 0.0
  %852 = vmatpush2.msra.mxu0 0.0
  %853 = vmatprep.subr.mxu0 0.0
  %854 = vmatpush2.msra.mxu0 0.0
  %855 = vmatprep.subr.mxu0 0.0
  %856 = vmatpush2.msra.mxu0 0.0
  %857 = vmatprep.subr.mxu0 0.0
  %858 = vmatpush2.msra.mxu0 0.0
  %859 = vmatprep.subr.mxu0 0.0
  %860 = vmatpush2.msra.mxu0 0.0
  %861 = vmatprep.subr.mxu0 0.0
  %862 = vmatpush2.msra.mxu0 0.0
  %863 = vmatprep.subr.mxu0 0.0
  %864 = vmatpush2.msra.mxu0 0.0
  %865 = vmatprep.subr.mxu0 0.0
  %866 = vmatpush2.msra.mxu0 0.0
  %867 = vmatprep.subr.mxu0 0.0
  %868 = vmatpush2.msra.mxu0 0.0
  %869 = vmatprep.subr.mxu0 0.0
  %870 = vmatpush2.msra.mxu0 0.0
  %871 = vmatprep.subr.mxu0 0.0
  %872 = vmatpush2.msra.mxu0 0.0
  %873 = vmatprep.subr.mxu0 0.0
  %874 = vmatpush2.msra.mxu0 0.0
  %875 = vmatprep.subr.mxu0 0.0
  %876 = vmatpush2.msra.mxu0 0.0
  %877 = vmatprep.subr.mxu0 0.0
  %878 = vmatpush2.msra.mxu0 0.0
  %879 = vmatprep.mubr.f32.mxu0 0.0
  %880 = vmatmul.mubr.f32.gmra.mxu0 %v813
  %v881 = vpop.f32.mrf.mxu0
  %v882 = vadd.f32 0.0, %v881
  %v883 = vpop.f32.mrf.mxu0
  %884 = vdwg.mxu0
  %v886 = vcombine.high %v882, %v882
  %v887 = vrot.slane %v882, 1
  %v888 = vrot.slane %v882, 2
  %v889 = vrot.slane %v882, 3
  %v890 = vrot.slane %v886, 1
  %v891 = vrot.slane %v886, 2
  %v892 = vrot.slane %v886, 3
  %v901 = vadd.f32 %v800, %v882
  %v902 = vadd.f32 %v801, %v887
  %v903 = vadd.f32 %v802, %v888
  %v904 = vadd.f32 %v803, %v889
  %v905 = vadd.f32 %v804, %v886
  %v906 = vadd.f32 %v805, %v890
  %v907 = vadd.f32 %v806, %v891
  %v908 = vadd.f32 %v807, %v892
  %v909 = vxor.u32 %v901, 2147483648
  %v910 = vxor.u32 %v902, 2147483648
  %v911 = vxor.u32 %v903, 2147483648
  %v912 = vxor.u32 %v904, 2147483648
  %v913 = vxor.u32 %v905, 2147483648
  %v914 = vxor.u32 %v906, 2147483648
  %v915 = vxor.u32 %v907, 2147483648
  %v916 = vxor.u32 %v908, 2147483648
  %v917 = vmul.f32 %v909, 1.442695
  %v918 = vpow.pop %v917
  %v919 = vmul.f32 %v910, 1.442695
  %v920 = vpow.pop %v919
  %v921 = vmul.f32 %v911, 1.442695
  %v922 = vpow.pop %v921
  %v923 = vmul.f32 %v912, 1.442695
  %v924 = vpow.pop %v923
  %v925 = vmul.f32 %v913, 1.442695
  %v926 = vpow.pop %v925
  %v927 = vmul.f32 %v914, 1.442695
  %v928 = vpow.pop %v927
  %v929 = vmul.f32 %v915, 1.442695
  %v930 = vpow.pop %v929
  %v931 = vmul.f32 %v916, 1.442695
  %v932 = vpow.pop %v931
  %v933 = vadd.f32 %v918, 1.0
  %v934 = vadd.f32 %v920, 1.0
  %v935 = vadd.f32 %v922, 1.0
  %v936 = vadd.f32 %v924, 1.0
  %v937 = vadd.f32 %v926, 1.0
  %v938 = vadd.f32 %v928, 1.0
  %v939 = vadd.f32 %v930, 1.0
  %v940 = vadd.f32 %v932, 1.0
  %v941 = vrcp.pop %v933
  %v942 = vmul.f32 1.0, %v941
  %v943 = vrcp.pop %v934
  %v944 = vmul.f32 1.0, %v943
  %v945 = vrcp.pop %v935
  %v946 = vmul.f32 1.0, %v945
  %v947 = vrcp.pop %v936
  %v948 = vmul.f32 1.0, %v947
  %v949 = vrcp.pop %v937
  %v950 = vmul.f32 1.0, %v949
  %v951 = vrcp.pop %v938
  %v952 = vmul.f32 1.0, %v951
  %v953 = vrcp.pop %v939
  %v954 = vmul.f32 1.0, %v953
  %v955 = vrcp.pop %v940
  %v956 = vmul.f32 1.0, %v955
  %v957 = vlaneseq
  %v958 = vshrl.u32 %v957, 7
  %v959 = vsub.s32 3, %v958
  %v960 = vrot.slane %v14, %v959
  %962 = vrot.lane.b32.xlu0 %v960, 64
  %v963 = vpop.permute.xlu0 %962
  %v965 = vadd.f32 %v882, %v963
  %v967 = vcombine.high %v965, %v965
  %v968 = vrot.slane %v965, 1
  %v969 = vrot.slane %v965, 2
  %v970 = vrot.slane %v965, 3
  %v971 = vrot.slane %v967, 1
  %v972 = vrot.slane %v967, 2
  %v973 = vrot.slane %v967, 3
  %974 = vrot.lane.b32.xlu0 %v965, 64
  %v975 = vpop.permute.xlu0 %974
  %976 = vrot.lane.b32.xlu0 %v968, 64
  %v977 = vpop.permute.xlu0 %976
  %978 = vrot.lane.b32.xlu0 %v969, 64
  %v979 = vpop.permute.xlu0 %978
  %980 = vrot.lane.b32.xlu0 %v970, 64
  %v981 = vpop.permute.xlu0 %980
  %982 = vrot.lane.b32.xlu0 %v967, 64
  %v983 = vpop.permute.xlu0 %982
  %984 = vrot.lane.b32.xlu0 %v971, 64
  %v985 = vpop.permute.xlu0 %984
  %986 = vrot.lane.b32.xlu0 %v972, 64
  %v987 = vpop.permute.xlu0 %986
  %988 = vrot.lane.b32.xlu0 %v973, 64
  %v989 = vpop.permute.xlu0 %988
  %v998 = vmul.f32 %v942, %v975
  %v999 = vmul.f32 %v944, %v977
  %v1000 = vmul.f32 %v946, %v979
  %v1001 = vmul.f32 %v948, %v981
  %v1002 = vmul.f32 %v950, %v983
  %v1003 = vmul.f32 %v952, %v985
  %v1004 = vmul.f32 %v954, %v987
  %v1005 = vmul.f32 %v956, %v989
  %1014 = vrot.lane.b32.xlu0 %v998, 64
  %v1015 = vpop.permute.xlu0 %1014
  %1016 = vrot.lane.b32.xlu0 %v999, 64
  %v1017 = vpop.permute.xlu0 %1016
  %1018 = vrot.lane.b32.xlu0 %v1000, 64
  %v1019 = vpop.permute.xlu0 %1018
  %1020 = vrot.lane.b32.xlu0 %v1001, 64
  %v1021 = vpop.permute.xlu0 %1020
  %1022 = vrot.lane.b32.xlu0 %v1002, 64
  %v1023 = vpop.permute.xlu0 %1022
  %1024 = vrot.lane.b32.xlu0 %v1003, 64
  %v1025 = vpop.permute.xlu0 %1024
  %1026 = vrot.lane.b32.xlu0 %v1004, 64
  %v1027 = vpop.permute.xlu0 %1026
  %1028 = vrot.lane.b32.xlu0 %v1005, 64
  %v1029 = vpop.permute.xlu0 %1028
  %v1038 = vadd.f32 %v800, %v1015
  %v1039 = vadd.f32 %v801, %v1017
  %v1040 = vadd.f32 %v802, %v1019
  %v1041 = vadd.f32 %v803, %v1021
  %v1042 = vadd.f32 %v804, %v1023
  %v1043 = vadd.f32 %v805, %v1025
  %v1044 = vadd.f32 %v806, %v1027
  %v1045 = vadd.f32 %v807, %v1029
  %v1046 = vtanh.pop %v1038
  %v1047 = vtanh.pop %v1039
  %v1048 = vtanh.pop %v1040
  %v1049 = vtanh.pop %v1041
  %v1050 = vtanh.pop %v1042
  %v1051 = vtanh.pop %v1043
  %v1052 = vtanh.pop %v1044
  %v1053 = vtanh.pop %v1045
  %v1054 = vsub.f32 1.0, %v942
  %v1055 = vsub.f32 1.0, %v944
  %v1056 = vsub.f32 1.0, %v946
  %v1057 = vsub.f32 1.0, %v948
  %v1058 = vsub.f32 1.0, %v950
  %v1059 = vsub.f32 1.0, %v952
  %v1060 = vsub.f32 1.0, %v954
  %v1061 = vsub.f32 1.0, %v956
  %1070 = vrot.lane.b32.xlu0 %v1046, 96
  %v1071 = vpop.permute.xlu0 %1070
  %1072 = vrot.lane.b32.xlu0 %v1047, 96
  %v1073 = vpop.permute.xlu0 %1072
  %1074 = vrot.lane.b32.xlu0 %v1048, 96
  %v1075 = vpop.permute.xlu0 %1074
  %1076 = vrot.lane.b32.xlu0 %v1049, 96
  %v1077 = vpop.permute.xlu0 %1076
  %1078 = vrot.lane.b32.xlu0 %v1050, 96
  %v1079 = vpop.permute.xlu0 %1078
  %1080 = vrot.lane.b32.xlu0 %v1051, 96
  %v1081 = vpop.permute.xlu0 %1080
  %1082 = vrot.lane.b32.xlu0 %v1052, 96
  %v1083 = vpop.permute.xlu0 %1082
  %1084 = vrot.lane.b32.xlu0 %v1053, 96
  %v1085 = vpop.permute.xlu0 %1084
  %v1094 = vmul.f32 %v1054, %v1071
  %v1095 = vmul.f32 %v1055, %v1073
  %v1096 = vmul.f32 %v1056, %v1075
  %v1097 = vmul.f32 %v1057, %v1077
  %v1098 = vmul.f32 %v1058, %v1079
  %v1099 = vmul.f32 %v1059, %v1081
  %v1100 = vmul.f32 %v1060, %v1083
  %v1101 = vmul.f32 %v1061, %v1085
  %v1102 = vmul.f32 %v942, 0.0
  %v1103 = vmul.f32 %v944, 0.0
  %v1104 = vmul.f32 %v946, 0.0
  %v1105 = vmul.f32 %v948, 0.0
  %v1106 = vmul.f32 %v950, 0.0
  %v1107 = vmul.f32 %v952, 0.0
  %v1108 = vmul.f32 %v954, 0.0
  %v1109 = vmul.f32 %v956, 0.0
  %v1110 = vadd.f32 %v1094, %v1102
  %v1111 = vadd.f32 %v1095, %v1103
  %v1112 = vadd.f32 %v1096, %v1104
  %v1113 = vadd.f32 %v1097, %v1105
  %v1114 = vadd.f32 %v1098, %v1106
  %v1115 = vadd.f32 %v1099, %v1107
  %v1116 = vadd.f32 %v1100, %v1108
  %v1117 = vadd.f32 %v1101, %v1109
  %v1126 = vlaneseq
  %v1127 = vshrl.u32 %v1126, 7
  %v1128 = vsub.s32 0, %v1127
  %v1129 = vrot.slane %v1110, %v1128
  %v1130 = vlaneseq
  %v1131 = vshrl.u32 %v1130, 7
  %v1132 = vsub.s32 0, %v1131
  %v1133 = vrot.slane %v1111, %v1132
  %v1134 = vlaneseq
  %v1135 = vshrl.u32 %v1134, 7
  %v1136 = vsub.s32 0, %v1135
  %v1137 = vrot.slane %v1112, %v1136
  %v1138 = vlaneseq
  %v1139 = vshrl.u32 %v1138, 7
  %v1140 = vsub.s32 0, %v1139
  %v1141 = vrot.slane %v1113, %v1140
  %v1142 = vlaneseq
  %v1143 = vshrl.u32 %v1142, 7
  %v1144 = vsub.s32 0, %v1143
  %v1145 = vrot.slane %v1114, %v1144
  %v1146 = vlaneseq
  %v1147 = vshrl.u32 %v1146, 7
  %v1148 = vsub.s32 0, %v1147
  %v1149 = vrot.slane %v1115, %v1148
  %v1150 = vlaneseq
  %v1151 = vshrl.u32 %v1150, 7
  %v1152 = vsub.s32 0, %v1151
  %v1153 = vrot.slane %v1116, %v1152
  %v1154 = vlaneseq
  %v1155 = vshrl.u32 %v1154, 7
  %v1156 = vsub.s32 0, %v1155
  %v1157 = vrot.slane %v1117, %v1156
  %vm1158 = vcmask 1041409
  %v1159 = vsel %vm1158, %v1133, %v1129
  %vm1160 = vcmask 1042434
  %v1161 = vsel %vm1160, %v1137, %v1159
  %vm1162 = vcmask 1043459
  %v1163 = vsel %vm1162, %v1141, %v1161
  %vm1164 = vcmask 1044484
  %v1165 = vsel %vm1164, %v1145, %v1163
  %vm1166 = vcmask 1045509
  %v1167 = vsel %vm1166, %v1149, %v1165
  %vm1168 = vcmask 1046534
  %v1169 = vsel %vm1168, %v1153, %v1167
  %vm1170 = vcmask 1047559
  %v1171 = vsel %vm1170, %v1157, %v1169
  %1172 = vrot.lane.b32.xlu0 %v1171, 96
  %v1173 = vpop.permute.xlu0 %1172
  %v1174 = vsel %vm464, %v1173, 0
  %1176 = vmatprep.subr.mxu0 0.0
  %1177 = vmatpush1.msra.mxu0 0.0
  %1178 = vmatprep.subr.mxu0 0.0
  %1179 = vmatpush1.msra.mxu0 0.0
  %1180 = vmatprep.subr.mxu0 0.0
  %1181 = vmatpush1.msra.mxu0 0.0
  %1182 = vmatprep.subr.mxu0 0.0
  %1183 = vmatpush1.msra.mxu0 0.0
  %1184 = vmatprep.subr.mxu0 0.0
  %1185 = vmatpush1.msra.mxu0 0.0
  %1186 = vmatprep.subr.mxu0 0.0
  %1187 = vmatpush1.msra.mxu0 0.0
  %1188 = vmatprep.subr.mxu0 0.0
  %1189 = vmatpush1.msra.mxu0 0.0
  %1190 = vmatprep.subr.mxu0 0.0
  %1191 = vmatpush1.msra.mxu0 0.0
  %1192 = vmatprep.subr.mxu0 0.0
  %1193 = vmatpush1.msra.mxu0 0.0
  %1194 = vmatprep.subr.mxu0 0.0
  %1195 = vmatpush1.msra.mxu0 0.0
  %1196 = vmatprep.subr.mxu0 0.0
  %1197 = vmatpush1.msra.mxu0 0.0
  %1198 = vmatprep.subr.mxu0 0.0
  %1199 = vmatpush1.msra.mxu0 0.0
  %1200 = vmatprep.subr.mxu0 0.0
  %1201 = vmatpush1.msra.mxu0 %v811
  %1202 = vmatprep.subr.mxu0 0.0
  %1203 = vmatpush1.msra.mxu0 %v810
  %1204 = vmatprep.subr.mxu0 0.0
  %1205 = vmatpush1.msra.mxu0 %v809
  %1206 = vmatprep.subr.mxu0 0.0
  %1207 = vmatpush1.msra.mxu0 %v808
  %1208 = vmatprep.subr.mxu0 0.0
  %1209 = vmatpush2.msra.mxu0 0.0
  %1210 = vmatprep.subr.mxu0 0.0
  %1211 = vmatpush2.msra.mxu0 0.0
  %1212 = vmatprep.subr.mxu0 0.0
  %1213 = vmatpush2.msra.mxu0 0.0
  %1214 = vmatprep.subr.mxu0 0.0
  %1215 = vmatpush2.msra.mxu0 0.0
  %1216 = vmatprep.subr.mxu0 0.0
  %1217 = vmatpush2.msra.mxu0 0.0
  %1218 = vmatprep.subr.mxu0 0.0
  %1219 = vmatpush2.msra.mxu0 0.0
  %1220 = vmatprep.subr.mxu0 0.0
  %1221 = vmatpush2.msra.mxu0 0.0
  %1222 = vmatprep.subr.mxu0 0.0
  %1223 = vmatpush2.msra.mxu0 0.0
  %1224 = vmatprep.subr.mxu0 0.0
  %1225 = vmatpush2.msra.mxu0 0.0
  %1226 = vmatprep.subr.mxu0 0.0
  %1227 = vmatpush2.msra.mxu0 0.0
  %1228 = vmatprep.subr.mxu0 0.0
  %1229 = vmatpush2.msra.mxu0 0.0
  %1230 = vmatprep.subr.mxu0 0.0
  %1231 = vmatpush2.msra.mxu0 0.0
  %1232 = vmatprep.subr.mxu0 0.0
  %1233 = vmatpush2.msra.mxu0 0.0
  %1234 = vmatprep.subr.mxu0 0.0
  %1235 = vmatpush2.msra.mxu0 0.0
  %1236 = vmatprep.subr.mxu0 0.0
  %1237 = vmatpush2.msra.mxu0 0.0
  %1238 = vmatprep.subr.mxu0 0.0
  %1239 = vmatpush2.msra.mxu0 0.0
  %1240 = vmatprep.mubr.f32.mxu0 0.0
  %1241 = vmatmul.mubr.f32.gmra.mxu0 %v1174
  %v1242 = vpop.f32.mrf.mxu0
  %v1243 = vadd.f32 0.0, %v1242
  %v1244 = vpop.f32.mrf.mxu0
  %1245 = vdwg.mxu0
  %v1247 = vcombine.high %v1243, %v1243
  %v1248 = vrot.slane %v1243, 7
  %v1249 = vrot.slane %v1243, 1
  %v1250 = vrot.slane %v1243, 2
  %v1251 = vrot.slane %v1247, 7
  %v1252 = vrot.slane %v1247, 1
  %v1253 = vrot.slane %v1247, 2
  %v1262 = vadd.f32 %v800, %v1248
  %v1263 = vadd.f32 %v801, %v1243
  %v1264 = vadd.f32 %v802, %v1249
  %v1265 = vadd.f32 %v803, %v1250
  %v1266 = vadd.f32 %v804, %v1251
  %v1267 = vadd.f32 %v805, %v1247
  %v1268 = vadd.f32 %v806, %v1252
  %v1269 = vadd.f32 %v807, %v1253
  %v1270 = vxor.u32 %v1262, 2147483648
  %v1271 = vxor.u32 %v1263, 2147483648
  %v1272 = vxor.u32 %v1264, 2147483648
  %v1273 = vxor.u32 %v1265, 2147483648
  %v1274 = vxor.u32 %v1266, 2147483648
  %v1275 = vxor.u32 %v1267, 2147483648
  %v1276 = vxor.u32 %v1268, 2147483648
  %v1277 = vxor.u32 %v1269, 2147483648
  %v1278 = vmul.f32 %v1270, 1.442695
  %v1279 = vpow.pop %v1278
  %v1280 = vmul.f32 %v1271, 1.442695
  %v1281 = vpow.pop %v1280
  %v1282 = vmul.f32 %v1272, 1.442695
  %v1283 = vpow.pop %v1282
  %v1284 = vmul.f32 %v1273, 1.442695
  %v1285 = vpow.pop %v1284
  %v1286 = vmul.f32 %v1274, 1.442695
  %v1287 = vpow.pop %v1286
  %v1288 = vmul.f32 %v1275, 1.442695
  %v1289 = vpow.pop %v1288
  %v1290 = vmul.f32 %v1276, 1.442695
  %v1291 = vpow.pop %v1290
  %v1292 = vmul.f32 %v1277, 1.442695
  %v1293 = vpow.pop %v1292
  %v1294 = vadd.f32 %v1279, 1.0
  %v1295 = vadd.f32 %v1281, 1.0
  %v1296 = vadd.f32 %v1283, 1.0
  %v1297 = vadd.f32 %v1285, 1.0
  %v1298 = vadd.f32 %v1287, 1.0
  %v1299 = vadd.f32 %v1289, 1.0
  %v1300 = vadd.f32 %v1291, 1.0
  %v1301 = vadd.f32 %v1293, 1.0
  %v1302 = vrcp.pop %v1294
  %v1303 = vmul.f32 1.0, %v1302
  %v1304 = vrcp.pop %v1295
  %v1305 = vmul.f32 1.0, %v1304
  %v1306 = vrcp.pop %v1296
  %v1307 = vmul.f32 1.0, %v1306
  %v1308 = vrcp.pop %v1297
  %v1309 = vmul.f32 1.0, %v1308
  %v1310 = vrcp.pop %v1298
  %v1311 = vmul.f32 1.0, %v1310
  %v1312 = vrcp.pop %v1299
  %v1313 = vmul.f32 1.0, %v1312
  %v1314 = vrcp.pop %v1300
  %v1315 = vmul.f32 1.0, %v1314
  %v1316 = vrcp.pop %v1301
  %v1317 = vmul.f32 1.0, %v1316
  %v1318 = vadd.f32 %v1243, %v963
  %v1320 = vcombine.high %v1318, %v1318
  %v1321 = vrot.slane %v1318, 7
  %v1322 = vrot.slane %v1318, 1
  %v1323 = vrot.slane %v1318, 2
  %v1324 = vrot.slane %v1320, 7
  %v1325 = vrot.slane %v1320, 1
  %v1326 = vrot.slane %v1320, 2
  %1327 = vrot.lane.b32.xlu0 %v1321, 64
  %v1328 = vpop.permute.xlu0 %1327
  %1329 = vrot.lane.b32.xlu0 %v1318, 64
  %v1330 = vpop.permute.xlu0 %1329
  %1331 = vrot.lane.b32.xlu0 %v1322, 64
  %v1332 = vpop.permute.xlu0 %1331
  %1333 = vrot.lane.b32.xlu0 %v1323, 64
  %v1334 = vpop.permute.xlu0 %1333
  %1335 = vrot.lane.b32.xlu0 %v1324, 64
  %v1336 = vpop.permute.xlu0 %1335
  %1337 = vrot.lane.b32.xlu0 %v1320, 64
  %v1338 = vpop.permute.xlu0 %1337
  %1339 = vrot.lane.b32.xlu0 %v1325, 64
  %v1340 = vpop.permute.xlu0 %1339
  %1341 = vrot.lane.b32.xlu0 %v1326, 64
  %v1342 = vpop.permute.xlu0 %1341
  %v1351 = vmul.f32 %v1303, %v1328
  %v1352 = vmul.f32 %v1305, %v1330
  %v1353 = vmul.f32 %v1307, %v1332
  %v1354 = vmul.f32 %v1309, %v1334
  %v1355 = vmul.f32 %v1311, %v1336
  %v1356 = vmul.f32 %v1313, %v1338
  %v1357 = vmul.f32 %v1315, %v1340
  %v1358 = vmul.f32 %v1317, %v1342
  %1367 = vrot.lane.b32.xlu0 %v1351, 64
  %v1368 = vpop.permute.xlu0 %1367
  %1369 = vrot.lane.b32.xlu0 %v1352, 64
  %v1370 = vpop.permute.xlu0 %1369
  %1371 = vrot.lane.b32.xlu0 %v1353, 64
  %v1372 = vpop.permute.xlu0 %1371
  %1373 = vrot.lane.b32.xlu0 %v1354, 64
  %v1374 = vpop.permute.xlu0 %1373
  %1375 = vrot.lane.b32.xlu0 %v1355, 64
  %v1376 = vpop.permute.xlu0 %1375
  %1377 = vrot.lane.b32.xlu0 %v1356, 64
  %v1378 = vpop.permute.xlu0 %1377
  %1379 = vrot.lane.b32.xlu0 %v1357, 64
  %v1380 = vpop.permute.xlu0 %1379
  %1381 = vrot.lane.b32.xlu0 %v1358, 64
  %v1382 = vpop.permute.xlu0 %1381
  %v1391 = vadd.f32 %v800, %v1368
  %v1392 = vadd.f32 %v801, %v1370
  %v1393 = vadd.f32 %v802, %v1372
  %v1394 = vadd.f32 %v803, %v1374
  %v1395 = vadd.f32 %v804, %v1376
  %v1396 = vadd.f32 %v805, %v1378
  %v1397 = vadd.f32 %v806, %v1380
  %v1398 = vadd.f32 %v807, %v1382
  %v1399 = vtanh.pop %v1391
  %v1400 = vtanh.pop %v1392
  %v1401 = vtanh.pop %v1393
  %v1402 = vtanh.pop %v1394
  %v1403 = vtanh.pop %v1395
  %v1404 = vtanh.pop %v1396
  %v1405 = vtanh.pop %v1397
  %v1406 = vtanh.pop %v1398
  %v1407 = vsub.f32 1.0, %v1303
  %v1408 = vsub.f32 1.0, %v1305
  %v1409 = vsub.f32 1.0, %v1307
  %v1410 = vsub.f32 1.0, %v1309
  %v1411 = vsub.f32 1.0, %v1311
  %v1412 = vsub.f32 1.0, %v1313
  %v1413 = vsub.f32 1.0, %v1315
  %v1414 = vsub.f32 1.0, %v1317
  %1423 = vrot.lane.b32.xlu0 %v1399, 96
  %v1424 = vpop.permute.xlu0 %1423
  %1425 = vrot.lane.b32.xlu0 %v1400, 96
  %v1426 = vpop.permute.xlu0 %1425
  %1427 = vrot.lane.b32.xlu0 %v1401, 96
  %v1428 = vpop.permute.xlu0 %1427
  %1429 = vrot.lane.b32.xlu0 %v1402, 96
  %v1430 = vpop.permute.xlu0 %1429
  %1431 = vrot.lane.b32.xlu0 %v1403, 96
  %v1432 = vpop.permute.xlu0 %1431
  %1433 = vrot.lane.b32.xlu0 %v1404, 96
  %v1434 = vpop.permute.xlu0 %1433
  %1435 = vrot.lane.b32.xlu0 %v1405, 96
  %v1436 = vpop.permute.xlu0 %1435
  %1437 = vrot.lane.b32.xlu0 %v1406, 96
  %v1438 = vpop.permute.xlu0 %1437
  %v1447 = vmul.f32 %v1407, %v1424
  %v1448 = vmul.f32 %v1408, %v1426
  %v1449 = vmul.f32 %v1409, %v1428
  %v1450 = vmul.f32 %v1410, %v1430
  %v1451 = vmul.f32 %v1411, %v1432
  %v1452 = vmul.f32 %v1412, %v1434
  %v1453 = vmul.f32 %v1413, %v1436
  %v1454 = vmul.f32 %v1414, %v1438
  %v1455 = vrot.slane %v1110, 7
  %v1456 = vrot.slane %v1111, 7
  %v1457 = vrot.slane %v1112, 7
  %v1458 = vrot.slane %v1113, 7
  %v1459 = vrot.slane %v1114, 7
  %v1460 = vrot.slane %v1115, 7
  %v1461 = vrot.slane %v1116, 7
  %v1462 = vrot.slane %v1117, 7
  %v1471 = vmul.f32 %v1303, %v1455
  %v1472 = vmul.f32 %v1305, %v1456
  %v1473 = vmul.f32 %v1307, %v1457
  %v1474 = vmul.f32 %v1309, %v1458
  %v1475 = vmul.f32 %v1311, %v1459
  %v1476 = vmul.f32 %v1313, %v1460
  %v1477 = vmul.f32 %v1315, %v1461
  %v1478 = vmul.f32 %v1317, %v1462
  %v1479 = vadd.f32 %v1447, %v1471
  %v1480 = vadd.f32 %v1448, %v1472
  %v1481 = vadd.f32 %v1449, %v1473
  %v1482 = vadd.f32 %v1450, %v1474
  %v1483 = vadd.f32 %v1451, %v1475
  %v1484 = vadd.f32 %v1452, %v1476
  %v1485 = vadd.f32 %v1453, %v1477
  %v1486 = vadd.f32 %v1454, %v1478
  %v1495 = vlaneseq
  %v1496 = vshrl.u32 %v1495, 7
  %v1497 = vsub.s32 1, %v1496
  %v1498 = vrot.slane %v1479, %v1497
  %v1499 = vlaneseq
  %v1500 = vshrl.u32 %v1499, 7
  %v1501 = vsub.s32 1, %v1500
  %v1502 = vrot.slane %v1480, %v1501
  %v1503 = vlaneseq
  %v1504 = vshrl.u32 %v1503, 7
  %v1505 = vsub.s32 1, %v1504
  %v1506 = vrot.slane %v1481, %v1505
  %v1507 = vlaneseq
  %v1508 = vshrl.u32 %v1507, 7
  %v1509 = vsub.s32 1, %v1508
  %v1510 = vrot.slane %v1482, %v1509
  %v1511 = vlaneseq
  %v1512 = vshrl.u32 %v1511, 7
  %v1513 = vsub.s32 1, %v1512
  %v1514 = vrot.slane %v1483, %v1513
  %v1515 = vlaneseq
  %v1516 = vshrl.u32 %v1515, 7
  %v1517 = vsub.s32 1, %v1516
  %v1518 = vrot.slane %v1484, %v1517
  %v1519 = vlaneseq
  %v1520 = vshrl.u32 %v1519, 7
  %v1521 = vsub.s32 1, %v1520
  %v1522 = vrot.slane %v1485, %v1521
  %v1523 = vlaneseq
  %v1524 = vshrl.u32 %v1523, 7
  %v1525 = vsub.s32 1, %v1524
  %v1526 = vrot.slane %v1486, %v1525
  %v1527 = vsel %vm1158, %v1502, %v1498
  %v1528 = vsel %vm1160, %v1506, %v1527
  %v1529 = vsel %vm1162, %v1510, %v1528
  %v1530 = vsel %vm1164, %v1514, %v1529
  %v1531 = vsel %vm1166, %v1518, %v1530
  %v1532 = vsel %vm1168, %v1522, %v1531
  %v1533 = vsel %vm1170, %v1526, %v1532
  %1534 = vrot.lane.b32.xlu0 %v1533, 96
  %v1535 = vpop.permute.xlu0 %1534
  %v1536 = vsel %vm464, %v1535, 0
  %1538 = vmatprep.subr.mxu0 0.0
  %1539 = vmatpush1.msra.mxu0 0.0
  %1540 = vmatprep.subr.mxu0 0.0
  %1541 = vmatpush1.msra.mxu0 0.0
  %1542 = vmatprep.subr.mxu0 0.0
  %1543 = vmatpush1.msra.mxu0 0.0
  %1544 = vmatprep.subr.mxu0 0.0
  %1545 = vmatpush1.msra.mxu0 0.0
  %1546 = vmatprep.subr.mxu0 0.0
  %1547 = vmatpush1.msra.mxu0 0.0
  %1548 = vmatprep.subr.mxu0 0.0
  %1549 = vmatpush1.msra.mxu0 0.0
  %1550 = vmatprep.subr.mxu0 0.0
  %1551 = vmatpush1.msra.mxu0 0.0
  %1552 = vmatprep.subr.mxu0 0.0
  %1553 = vmatpush1.msra.mxu0 0.0
  %1554 = vmatprep.subr.mxu0 0.0
  %1555 = vmatpush1.msra.mxu0 0.0
  %1556 = vmatprep.subr.mxu0 0.0
  %1557 = vmatpush1.msra.mxu0 0.0
  %1558 = vmatprep.subr.mxu0 0.0
  %1559 = vmatpush1.msra.mxu0 0.0
  %1560 = vmatprep.subr.mxu0 0.0
  %1561 = vmatpush1.msra.mxu0 0.0
  %1562 = vmatprep.subr.mxu0 0.0
  %1563 = vmatpush1.msra.mxu0 %v811
  %1564 = vmatprep.subr.mxu0 0.0
  %1565 = vmatpush1.msra.mxu0 %v810
  %1566 = vmatprep.subr.mxu0 0.0
  %1567 = vmatpush1.msra.mxu0 %v809
  %1568 = vmatprep.subr.mxu0 0.0
  %1569 = vmatpush1.msra.mxu0 %v808
  %1570 = vmatprep.subr.mxu0 0.0
  %1571 = vmatpush2.msra.mxu0 0.0
  %1572 = vmatprep.subr.mxu0 0.0
  %1573 = vmatpush2.msra.mxu0 0.0
  %1574 = vmatprep.subr.mxu0 0.0
  %1575 = vmatpush2.msra.mxu0 0.0
  %1576 = vmatprep.subr.mxu0 0.0
  %1577 = vmatpush2.msra.mxu0 0.0
  %1578 = vmatprep.subr.mxu0 0.0
  %1579 = vmatpush2.msra.mxu0 0.0
  %1580 = vmatprep.subr.mxu0 0.0
  %1581 = vmatpush2.msra.mxu0 0.0
  %1582 = vmatprep.subr.mxu0 0.0
  %1583 = vmatpush2.msra.mxu0 0.0
  %1584 = vmatprep.subr.mxu0 0.0
  %1585 = vmatpush2.msra.mxu0 0.0
  %1586 = vmatprep.subr.mxu0 0.0
  %1587 = vmatpush2.msra.mxu0 0.0
  %1588 = vmatprep.subr.mxu0 0.0
  %1589 = vmatpush2.msra.mxu0 0.0
  %1590 = vmatprep.subr.mxu0 0.0
  %1591 = vmatpush2.msra.mxu0 0.0
  %1592 = vmatprep.subr.mxu0 0.0
  %1593 = vmatpush2.msra.mxu0 0.0
  %1594 = vmatprep.subr.mxu0 0.0
  %1595 = vmatpush2.msra.mxu0 0.0
  %1596 = vmatprep.subr.mxu0 0.0
  %1597 = vmatpush2.msra.mxu0 0.0
  %1598 = vmatprep.subr.mxu0 0.0
  %1599 = vmatpush2.msra.mxu0 0.0
  %1600 = vmatprep.subr.mxu0 0.0
  %1601 = vmatpush2.msra.mxu0 0.0
  %1602 = vmatprep.mubr.f32.mxu0 0.0
  %1603 = vmatmul.mubr.f32.gmra.mxu0 %v1536
  %v1604 = vpop.f32.mrf.mxu0
  %v1605 = vadd.f32 0.0, %v1604
  %v1606 = vpop.f32.mrf.mxu0
  %1607 = vdwg.mxu0
  %v1609 = vcombine.high %v1605, %v1605
  %v1610 = vrot.slane %v1605, 6
  %v1611 = vrot.slane %v1605, 7
  %v1612 = vrot.slane %v1605, 1
  %v1613 = vrot.slane %v1609, 6
  %v1614 = vrot.slane %v1609, 7
  %v1615 = vrot.slane %v1609, 1
  %v1624 = vadd.f32 %v800, %v1610
  %v1625 = vadd.f32 %v801, %v1611
  %v1626 = vadd.f32 %v802, %v1605
  %v1627 = vadd.f32 %v803, %v1612
  %v1628 = vadd.f32 %v804, %v1613
  %v1629 = vadd.f32 %v805, %v1614
  %v1630 = vadd.f32 %v806, %v1609
  %v1631 = vadd.f32 %v807, %v1615
  %v1632 = vxor.u32 %v1624, 2147483648
  %v1633 = vxor.u32 %v1625, 2147483648
  %v1634 = vxor.u32 %v1626, 2147483648
  %v1635 = vxor.u32 %v1627, 2147483648
  %v1636 = vxor.u32 %v1628, 2147483648
  %v1637 = vxor.u32 %v1629, 2147483648
  %v1638 = vxor.u32 %v1630, 2147483648
  %v1639 = vxor.u32 %v1631, 2147483648
  %v1640 = vmul.f32 %v1632, 1.442695
  %v1641 = vpow.pop %v1640
  %v1642 = vmul.f32 %v1633, 1.442695
  %v1643 = vpow.pop %v1642
  %v1644 = vmul.f32 %v1634, 1.442695
  %v1645 = vpow.pop %v1644
  %v1646 = vmul.f32 %v1635, 1.442695
  %v1647 = vpow.pop %v1646
  %v1648 = vmul.f32 %v1636, 1.442695
  %v1649 = vpow.pop %v1648
  %v1650 = vmul.f32 %v1637, 1.442695
  %v1651 = vpow.pop %v1650
  %v1652 = vmul.f32 %v1638, 1.442695
  %v1653 = vpow.pop %v1652
  %v1654 = vmul.f32 %v1639, 1.442695
  %v1655 = vpow.pop %v1654
  %v1656 = vadd.f32 %v1641, 1.0
  %v1657 = vadd.f32 %v1643, 1.0
  %v1658 = vadd.f32 %v1645, 1.0
  %v1659 = vadd.f32 %v1647, 1.0
  %v1660 = vadd.f32 %v1649, 1.0
  %v1661 = vadd.f32 %v1651, 1.0
  %v1662 = vadd.f32 %v1653, 1.0
  %v1663 = vadd.f32 %v1655, 1.0
  %v1664 = vrcp.pop %v1656
  %v1665 = vmul.f32 1.0, %v1664
  %v1666 = vrcp.pop %v1657
  %v1667 = vmul.f32 1.0, %v1666
  %v1668 = vrcp.pop %v1658
  %v1669 = vmul.f32 1.0, %v1668
  %v1670 = vrcp.pop %v1659
  %v1671 = vmul.f32 1.0, %v1670
  %v1672 = vrcp.pop %v1660
  %v1673 = vmul.f32 1.0, %v1672
  %v1674 = vrcp.pop %v1661
  %v1675 = vmul.f32 1.0, %v1674
  %v1676 = vrcp.pop %v1662
  %v1677 = vmul.f32 1.0, %v1676
  %v1678 = vrcp.pop %v1663
  %v1679 = vmul.f32 1.0, %v1678
  %v1680 = vadd.f32 %v1605, %v963
  %v1682 = vcombine.high %v1680, %v1680
  %v1683 = vrot.slane %v1680, 6
  %v1684 = vrot.slane %v1680, 7
  %v1685 = vrot.slane %v1680, 1
  %v1686 = vrot.slane %v1682, 6
  %v1687 = vrot.slane %v1682, 7
  %v1688 = vrot.slane %v1682, 1
  %1689 = vrot.lane.b32.xlu0 %v1683, 64
  %v1690 = vpop.permute.xlu0 %1689
  %1691 = vrot.lane.b32.xlu0 %v1684, 64
  %v1692 = vpop.permute.xlu0 %1691
  %1693 = vrot.lane.b32.xlu0 %v1680, 64
  %v1694 = vpop.permute.xlu0 %1693
  %1695 = vrot.lane.b32.xlu0 %v1685, 64
  %v1696 = vpop.permute.xlu0 %1695
  %1697 = vrot.lane.b32.xlu0 %v1686, 64
  %v1698 = vpop.permute.xlu0 %1697
  %1699 = vrot.lane.b32.xlu0 %v1687, 64
  %v1700 = vpop.permute.xlu0 %1699
  %1701 = vrot.lane.b32.xlu0 %v1682, 64
  %v1702 = vpop.permute.xlu0 %1701
  %1703 = vrot.lane.b32.xlu0 %v1688, 64
  %v1704 = vpop.permute.xlu0 %1703
  %v1713 = vmul.f32 %v1665, %v1690
  %v1714 = vmul.f32 %v1667, %v1692
  %v1715 = vmul.f32 %v1669, %v1694
  %v1716 = vmul.f32 %v1671, %v1696
  %v1717 = vmul.f32 %v1673, %v1698
  %v1718 = vmul.f32 %v1675, %v1700
  %v1719 = vmul.f32 %v1677, %v1702
  %v1720 = vmul.f32 %v1679, %v1704
  %1729 = vrot.lane.b32.xlu0 %v1713, 64
  %v1730 = vpop.permute.xlu0 %1729
  %1731 = vrot.lane.b32.xlu0 %v1714, 64
  %v1732 = vpop.permute.xlu0 %1731
  %1733 = vrot.lane.b32.xlu0 %v1715, 64
  %v1734 = vpop.permute.xlu0 %1733
  %1735 = vrot.lane.b32.xlu0 %v1716, 64
  %v1736 = vpop.permute.xlu0 %1735
  %1737 = vrot.lane.b32.xlu0 %v1717, 64
  %v1738 = vpop.permute.xlu0 %1737
  %1739 = vrot.lane.b32.xlu0 %v1718, 64
  %v1740 = vpop.permute.xlu0 %1739
  %1741 = vrot.lane.b32.xlu0 %v1719, 64
  %v1742 = vpop.permute.xlu0 %1741
  %1743 = vrot.lane.b32.xlu0 %v1720, 64
  %v1744 = vpop.permute.xlu0 %1743
  %v1753 = vadd.f32 %v800, %v1730
  %v1754 = vadd.f32 %v801, %v1732
  %v1755 = vadd.f32 %v802, %v1734
  %v1756 = vadd.f32 %v803, %v1736
  %v1757 = vadd.f32 %v804, %v1738
  %v1758 = vadd.f32 %v805, %v1740
  %v1759 = vadd.f32 %v806, %v1742
  %v1760 = vadd.f32 %v807, %v1744
  %v1761 = vtanh.pop %v1753
  %v1762 = vtanh.pop %v1754
  %v1763 = vtanh.pop %v1755
  %v1764 = vtanh.pop %v1756
  %v1765 = vtanh.pop %v1757
  %v1766 = vtanh.pop %v1758
  %v1767 = vtanh.pop %v1759
  %v1768 = vtanh.pop %v1760
  %v1769 = vsub.f32 1.0, %v1665
  %v1770 = vsub.f32 1.0, %v1667
  %v1771 = vsub.f32 1.0, %v1669
  %v1772 = vsub.f32 1.0, %v1671
  %v1773 = vsub.f32 1.0, %v1673
  %v1774 = vsub.f32 1.0, %v1675
  %v1775 = vsub.f32 1.0, %v1677
  %v1776 = vsub.f32 1.0, %v1679
  %1785 = vrot.lane.b32.xlu0 %v1761, 96
  %v1786 = vpop.permute.xlu0 %1785
  %1787 = vrot.lane.b32.xlu0 %v1762, 96
  %v1788 = vpop.permute.xlu0 %1787
  %1789 = vrot.lane.b32.xlu0 %v1763, 96
  %v1790 = vpop.permute.xlu0 %1789
  %1791 = vrot.lane.b32.xlu0 %v1764, 96
  %v1792 = vpop.permute.xlu0 %1791
  %1793 = vrot.lane.b32.xlu0 %v1765, 96
  %v1794 = vpop.permute.xlu0 %1793
  %1795 = vrot.lane.b32.xlu0 %v1766, 96
  %v1796 = vpop.permute.xlu0 %1795
  %1797 = vrot.lane.b32.xlu0 %v1767, 96
  %v1798 = vpop.permute.xlu0 %1797
  %1799 = vrot.lane.b32.xlu0 %v1768, 96
  %v1800 = vpop.permute.xlu0 %1799
  %v1809 = vmul.f32 %v1769, %v1786
  %v1810 = vmul.f32 %v1770, %v1788
  %v1811 = vmul.f32 %v1771, %v1790
  %v1812 = vmul.f32 %v1772, %v1792
  %v1813 = vmul.f32 %v1773, %v1794
  %v1814 = vmul.f32 %v1774, %v1796
  %v1815 = vmul.f32 %v1775, %v1798
  %v1816 = vmul.f32 %v1776, %v1800
  %v1817 = vrot.slane %v1479, 7
  %v1818 = vrot.slane %v1480, 7
  %v1819 = vrot.slane %v1481, 7
  %v1820 = vrot.slane %v1482, 7
  %v1821 = vrot.slane %v1483, 7
  %v1822 = vrot.slane %v1484, 7
  %v1823 = vrot.slane %v1485, 7
  %v1824 = vrot.slane %v1486, 7
  %v1833 = vmul.f32 %v1665, %v1817
  %v1834 = vmul.f32 %v1667, %v1818
  %v1835 = vmul.f32 %v1669, %v1819
  %v1836 = vmul.f32 %v1671, %v1820
  %v1837 = vmul.f32 %v1673, %v1821
  %v1838 = vmul.f32 %v1675, %v1822
  %v1839 = vmul.f32 %v1677, %v1823
  %v1840 = vmul.f32 %v1679, %v1824
  %v1841 = vadd.f32 %v1809, %v1833
  %v1842 = vadd.f32 %v1810, %v1834
  %v1843 = vadd.f32 %v1811, %v1835
  %v1844 = vadd.f32 %v1812, %v1836
  %v1845 = vadd.f32 %v1813, %v1837
  %v1846 = vadd.f32 %v1814, %v1838
  %v1847 = vadd.f32 %v1815, %v1839
  %v1848 = vadd.f32 %v1816, %v1840
  %v1857 = vlaneseq
  %v1858 = vshrl.u32 %v1857, 7
  %v1859 = vsub.s32 2, %v1858
  %v1860 = vrot.slane %v1841, %v1859
  %v1861 = vlaneseq
  %v1862 = vshrl.u32 %v1861, 7
  %v1863 = vsub.s32 2, %v1862
  %v1864 = vrot.slane %v1842, %v1863
  %v1865 = vlaneseq
  %v1866 = vshrl.u32 %v1865, 7
  %v1867 = vsub.s32 2, %v1866
  %v1868 = vrot.slane %v1843, %v1867
  %v1869 = vlaneseq
  %v1870 = vshrl.u32 %v1869, 7
  %v1871 = vsub.s32 2, %v1870
  %v1872 = vrot.slane %v1844, %v1871
  %v1873 = vlaneseq
  %v1874 = vshrl.u32 %v1873, 7
  %v1875 = vsub.s32 2, %v1874
  %v1876 = vrot.slane %v1845, %v1875
  %v1877 = vlaneseq
  %v1878 = vshrl.u32 %v1877, 7
  %v1879 = vsub.s32 2, %v1878
  %v1880 = vrot.slane %v1846, %v1879
  %v1881 = vlaneseq
  %v1882 = vshrl.u32 %v1881, 7
  %v1883 = vsub.s32 2, %v1882
  %v1884 = vrot.slane %v1847, %v1883
  %v1885 = vlaneseq
  %v1886 = vshrl.u32 %v1885, 7
  %v1887 = vsub.s32 2, %v1886
  %v1888 = vrot.slane %v1848, %v1887
  %v1889 = vsel %vm1158, %v1864, %v1860
  %v1890 = vsel %vm1160, %v1868, %v1889
  %v1891 = vsel %vm1162, %v1872, %v1890
  %v1892 = vsel %vm1164, %v1876, %v1891
  %v1893 = vsel %vm1166, %v1880, %v1892
  %v1894 = vsel %vm1168, %v1884, %v1893
  %v1895 = vsel %vm1170, %v1888, %v1894
  %1896 = vrot.lane.b32.xlu0 %v1895, 96
  %v1897 = vpop.permute.xlu0 %1896
  %v1898 = vsel %vm464, %v1897, 0
  %1900 = vmatprep.subr.mxu0 0.0
  %1901 = vmatpush1.msra.mxu0 0.0
  %1902 = vmatprep.subr.mxu0 0.0
  %1903 = vmatpush1.msra.mxu0 0.0
  %1904 = vmatprep.subr.mxu0 0.0
  %1905 = vmatpush1.msra.mxu0 0.0
  %1906 = vmatprep.subr.mxu0 0.0
  %1907 = vmatpush1.msra.mxu0 0.0
  %1908 = vmatprep.subr.mxu0 0.0
  %1909 = vmatpush1.msra.mxu0 0.0
  %1910 = vmatprep.subr.mxu0 0.0
  %1911 = vmatpush1.msra.mxu0 0.0
  %1912 = vmatprep.subr.mxu0 0.0
  %1913 = vmatpush1.msra.mxu0 0.0
  %1914 = vmatprep.subr.mxu0 0.0
  %1915 = vmatpush1.msra.mxu0 0.0
  %1916 = vmatprep.subr.mxu0 0.0
  %1917 = vmatpush1.msra.mxu0 0.0
  %1918 = vmatprep.subr.mxu0 0.0
  %1919 = vmatpush1.msra.mxu0 0.0
  %1920 = vmatprep.subr.mxu0 0.0
  %1921 = vmatpush1.msra.mxu0 0.0
  %1922 = vmatprep.subr.mxu0 0.0
  %1923 = vmatpush1.msra.mxu0 0.0
  %1924 = vmatprep.subr.mxu0 0.0
  %1925 = vmatpush1.msra.mxu0 %v811
  %1926 = vmatprep.subr.mxu0 0.0
  %1927 = vmatpush1.msra.mxu0 %v810
  %1928 = vmatprep.subr.mxu0 0.0
  %1929 = vmatpush1.msra.mxu0 %v809
  %1930 = vmatprep.subr.mxu0 0.0
  %1931 = vmatpush1.msra.mxu0 %v808
  %1932 = vmatprep.subr.mxu0 0.0
  %1933 = vmatpush2.msra.mxu0 0.0
  %1934 = vmatprep.subr.mxu0 0.0
  %1935 = vmatpush2.msra.mxu0 0.0
  %1936 = vmatprep.subr.mxu0 0.0
  %1937 = vmatpush2.msra.mxu0 0.0
  %1938 = vmatprep.subr.mxu0 0.0
  %1939 = vmatpush2.msra.mxu0 0.0
  %1940 = vmatprep.subr.mxu0 0.0
  %1941 = vmatpush2.msra.mxu0 0.0
  %1942 = vmatprep.subr.mxu0 0.0
  %1943 = vmatpush2.msra.mxu0 0.0
  %1944 = vmatprep.subr.mxu0 0.0
  %1945 = vmatpush2.msra.mxu0 0.0
  %1946 = vmatprep.subr.mxu0 0.0
  %1947 = vmatpush2.msra.mxu0 0.0
  %1948 = vmatprep.subr.mxu0 0.0
  %1949 = vmatpush2.msra.mxu0 0.0
  %1950 = vmatprep.subr.mxu0 0.0
  %1951 = vmatpush2.msra.mxu0 0.0
  %1952 = vmatprep.subr.mxu0 0.0
  %1953 = vmatpush2.msra.mxu0 0.0
  %1954 = vmatprep.subr.mxu0 0.0
  %1955 = vmatpush2.msra.mxu0 0.0
  %1956 = vmatprep.subr.mxu0 0.0
  %1957 = vmatpush2.msra.mxu0 0.0
  %1958 = vmatprep.subr.mxu0 0.0
  %1959 = vmatpush2.msra.mxu0 0.0
  %1960 = vmatprep.subr.mxu0 0.0
  %1961 = vmatpush2.msra.mxu0 0.0
  %1962 = vmatprep.subr.mxu0 0.0
  %1963 = vmatpush2.msra.mxu0 0.0
  %1964 = vmatprep.mubr.f32.mxu0 0.0
  %1965 = vmatmul.mubr.f32.gmra.mxu0 %v1898
  %v1966 = vpop.f32.mrf.mxu0
  %v1967 = vadd.f32 0.0, %v1966
  %v1968 = vpop.f32.mrf.mxu0
  %1969 = vdwg.mxu0
  %v1971 = vcombine.high %v1967, %v1967
  %v1972 = vrot.slane %v1967, 5
  %v1973 = vrot.slane %v1967, 6
  %v1974 = vrot.slane %v1967, 7
  %v1975 = vrot.slane %v1971, 5
  %v1976 = vrot.slane %v1971, 6
  %v1977 = vrot.slane %v1971, 7
  %v1986 = vadd.f32 %v800, %v1972
  %v1987 = vadd.f32 %v801, %v1973
  %v1988 = vadd.f32 %v802, %v1974
  %v1989 = vadd.f32 %v803, %v1967
  %v1990 = vadd.f32 %v804, %v1975
  %v1991 = vadd.f32 %v805, %v1976
  %v1992 = vadd.f32 %v806, %v1977
  %v1993 = vadd.f32 %v807, %v1971
  %v1994 = vxor.u32 %v1986, 2147483648
  %v1995 = vxor.u32 %v1987, 2147483648
  %v1996 = vxor.u32 %v1988, 2147483648
  %v1997 = vxor.u32 %v1989, 2147483648
  %v1998 = vxor.u32 %v1990, 2147483648
  %v1999 = vxor.u32 %v1991, 2147483648
  %v2000 = vxor.u32 %v1992, 2147483648
  %v2001 = vxor.u32 %v1993, 2147483648
  %v2002 = vmul.f32 %v1994, 1.442695
  %v2003 = vpow.pop %v2002
  %v2004 = vmul.f32 %v1995, 1.442695
  %v2005 = vpow.pop %v2004
  %v2006 = vmul.f32 %v1996, 1.442695
  %v2007 = vpow.pop %v2006
  %v2008 = vmul.f32 %v1997, 1.442695
  %v2009 = vpow.pop %v2008
  %v2010 = vmul.f32 %v1998, 1.442695
  %v2011 = vpow.pop %v2010
  %v2012 = vmul.f32 %v1999, 1.442695
  %v2013 = vpow.pop %v2012
  %v2014 = vmul.f32 %v2000, 1.442695
  %v2015 = vpow.pop %v2014
  %v2016 = vmul.f32 %v2001, 1.442695
  %v2017 = vpow.pop %v2016
  %v2018 = vadd.f32 %v2003, 1.0
  %v2019 = vadd.f32 %v2005, 1.0
  %v2020 = vadd.f32 %v2007, 1.0
  %v2021 = vadd.f32 %v2009, 1.0
  %v2022 = vadd.f32 %v2011, 1.0
  %v2023 = vadd.f32 %v2013, 1.0
  %v2024 = vadd.f32 %v2015, 1.0
  %v2025 = vadd.f32 %v2017, 1.0
  %v2026 = vrcp.pop %v2018
  %v2027 = vmul.f32 1.0, %v2026
  %v2028 = vrcp.pop %v2019
  %v2029 = vmul.f32 1.0, %v2028
  %v2030 = vrcp.pop %v2020
  %v2031 = vmul.f32 1.0, %v2030
  %v2032 = vrcp.pop %v2021
  %v2033 = vmul.f32 1.0, %v2032
  %v2034 = vrcp.pop %v2022
  %v2035 = vmul.f32 1.0, %v2034
  %v2036 = vrcp.pop %v2023
  %v2037 = vmul.f32 1.0, %v2036
  %v2038 = vrcp.pop %v2024
  %v2039 = vmul.f32 1.0, %v2038
  %v2040 = vrcp.pop %v2025
  %v2041 = vmul.f32 1.0, %v2040
  %v2042 = vadd.f32 %v1967, %v963
  %v2044 = vcombine.high %v2042, %v2042
  %v2045 = vrot.slane %v2042, 5
  %v2046 = vrot.slane %v2042, 6
  %v2047 = vrot.slane %v2042, 7
  %v2048 = vrot.slane %v2044, 5
  %v2049 = vrot.slane %v2044, 6
  %v2050 = vrot.slane %v2044, 7
  %2051 = vrot.lane.b32.xlu0 %v2045, 64
  %v2052 = vpop.permute.xlu0 %2051
  %2053 = vrot.lane.b32.xlu0 %v2046, 64
  %v2054 = vpop.permute.xlu0 %2053
  %2055 = vrot.lane.b32.xlu0 %v2047, 64
  %v2056 = vpop.permute.xlu0 %2055
  %2057 = vrot.lane.b32.xlu0 %v2042, 64
  %v2058 = vpop.permute.xlu0 %2057
  %2059 = vrot.lane.b32.xlu0 %v2048, 64
  %v2060 = vpop.permute.xlu0 %2059
  %2061 = vrot.lane.b32.xlu0 %v2049, 64
  %v2062 = vpop.permute.xlu0 %2061
  %2063 = vrot.lane.b32.xlu0 %v2050, 64
  %v2064 = vpop.permute.xlu0 %2063
  %2065 = vrot.lane.b32.xlu0 %v2044, 64
  %v2066 = vpop.permute.xlu0 %2065
  %v2075 = vmul.f32 %v2027, %v2052
  %v2076 = vmul.f32 %v2029, %v2054
  %v2077 = vmul.f32 %v2031, %v2056
  %v2078 = vmul.f32 %v2033, %v2058
  %v2079 = vmul.f32 %v2035, %v2060
  %v2080 = vmul.f32 %v2037, %v2062
  %v2081 = vmul.f32 %v2039, %v2064
  %v2082 = vmul.f32 %v2041, %v2066
  %2091 = vrot.lane.b32.xlu0 %v2075, 64
  %v2092 = vpop.permute.xlu0 %2091
  %2093 = vrot.lane.b32.xlu0 %v2076, 64
  %v2094 = vpop.permute.xlu0 %2093
  %2095 = vrot.lane.b32.xlu0 %v2077, 64
  %v2096 = vpop.permute.xlu0 %2095
  %2097 = vrot.lane.b32.xlu0 %v2078, 64
  %v2098 = vpop.permute.xlu0 %2097
  %2099 = vrot.lane.b32.xlu0 %v2079, 64
  %v2100 = vpop.permute.xlu0 %2099
  %2101 = vrot.lane.b32.xlu0 %v2080, 64
  %v2102 = vpop.permute.xlu0 %2101
  %2103 = vrot.lane.b32.xlu0 %v2081, 64
  %v2104 = vpop.permute.xlu0 %2103
  %2105 = vrot.lane.b32.xlu0 %v2082, 64
  %v2106 = vpop.permute.xlu0 %2105
  %v2115 = vadd.f32 %v800, %v2092
  %v2116 = vadd.f32 %v801, %v2094
  %v2117 = vadd.f32 %v802, %v2096
  %v2118 = vadd.f32 %v803, %v2098
  %v2119 = vadd.f32 %v804, %v2100
  %v2120 = vadd.f32 %v805, %v2102
  %v2121 = vadd.f32 %v806, %v2104
  %v2122 = vadd.f32 %v807, %v2106
  %v2123 = vtanh.pop %v2115
  %v2124 = vtanh.pop %v2116
  %v2125 = vtanh.pop %v2117
  %v2126 = vtanh.pop %v2118
  %v2127 = vtanh.pop %v2119
  %v2128 = vtanh.pop %v2120
  %v2129 = vtanh.pop %v2121
  %v2130 = vtanh.pop %v2122
  %v2131 = vsub.f32 1.0, %v2027
  %v2132 = vsub.f32 1.0, %v2029
  %v2133 = vsub.f32 1.0, %v2031
  %v2134 = vsub.f32 1.0, %v2033
  %v2135 = vsub.f32 1.0, %v2035
  %v2136 = vsub.f32 1.0, %v2037
  %v2137 = vsub.f32 1.0, %v2039
  %v2138 = vsub.f32 1.0, %v2041
  %2147 = vrot.lane.b32.xlu0 %v2123, 96
  %v2148 = vpop.permute.xlu0 %2147
  %2149 = vrot.lane.b32.xlu0 %v2124, 96
  %v2150 = vpop.permute.xlu0 %2149
  %2151 = vrot.lane.b32.xlu0 %v2125, 96
  %v2152 = vpop.permute.xlu0 %2151
  %2153 = vrot.lane.b32.xlu0 %v2126, 96
  %v2154 = vpop.permute.xlu0 %2153
  %2155 = vrot.lane.b32.xlu0 %v2127, 96
  %v2156 = vpop.permute.xlu0 %2155
  %2157 = vrot.lane.b32.xlu0 %v2128, 96
  %v2158 = vpop.permute.xlu0 %2157
  %2159 = vrot.lane.b32.xlu0 %v2129, 96
  %v2160 = vpop.permute.xlu0 %2159
  %2161 = vrot.lane.b32.xlu0 %v2130, 96
  %v2162 = vpop.permute.xlu0 %2161
  %v2171 = vmul.f32 %v2131, %v2148
  %v2172 = vmul.f32 %v2132, %v2150
  %v2173 = vmul.f32 %v2133, %v2152
  %v2174 = vmul.f32 %v2134, %v2154
  %v2175 = vmul.f32 %v2135, %v2156
  %v2176 = vmul.f32 %v2136, %v2158
  %v2177 = vmul.f32 %v2137, %v2160
  %v2178 = vmul.f32 %v2138, %v2162
  %v2179 = vrot.slane %v1841, 7
  %v2180 = vrot.slane %v1842, 7
  %v2181 = vrot.slane %v1843, 7
  %v2182 = vrot.slane %v1844, 7
  %v2183 = vrot.slane %v1845, 7
  %v2184 = vrot.slane %v1846, 7
  %v2185 = vrot.slane %v1847, 7
  %v2186 = vrot.slane %v1848, 7
  %v2195 = vmul.f32 %v2027, %v2179
  %v2196 = vmul.f32 %v2029, %v2180
  %v2197 = vmul.f32 %v2031, %v2181
  %v2198 = vmul.f32 %v2033, %v2182
  %v2199 = vmul.f32 %v2035, %v2183
  %v2200 = vmul.f32 %v2037, %v2184
  %v2201 = vmul.f32 %v2039, %v2185
  %v2202 = vmul.f32 %v2041, %v2186
  %v2203 = vadd.f32 %v2171, %v2195
  %v2204 = vadd.f32 %v2172, %v2196
  %v2205 = vadd.f32 %v2173, %v2197
  %v2206 = vadd.f32 %v2174, %v2198
  %v2207 = vadd.f32 %v2175, %v2199
  %v2208 = vadd.f32 %v2176, %v2200
  %v2209 = vadd.f32 %v2177, %v2201
  %v2210 = vadd.f32 %v2178, %v2202
  %v2211 = vld [vmem:[%s1 + $0x80] sm:$0xff]
  %v2212 = vld [vmem:[%s1 + $0x88] sm:$0xff]
  %v2213 = vld [vmem:[%s1 + $0x90] sm:$0xff]
  %v2214 = vld [vmem:[%s1 + $0x98] sm:$0xff]
  %v2215 = vlaneseq
  %v2216 = vshrl.u32 %v2215, 7
  %v2217 = vsub.s32 4, %v2216
  %v2218 = vrot.slane %v14, %v2217
  %v2227 = vlaneseq
  %v2228 = vshrl.u32 %v2227, 7
  %v2229 = vsub.s32 3, %v2228
  %v2230 = vrot.slane %v2203, %v2229
  %v2231 = vlaneseq
  %v2232 = vshrl.u32 %v2231, 7
  %v2233 = vsub.s32 3, %v2232
  %v2234 = vrot.slane %v2204, %v2233
  %v2235 = vlaneseq
  %v2236 = vshrl.u32 %v2235, 7
  %v2237 = vsub.s32 3, %v2236
  %v2238 = vrot.slane %v2205, %v2237
  %v2239 = vlaneseq
  %v2240 = vshrl.u32 %v2239, 7
  %v2241 = vsub.s32 3, %v2240
  %v2242 = vrot.slane %v2206, %v2241
  %v2243 = vlaneseq
  %v2244 = vshrl.u32 %v2243, 7
  %v2245 = vsub.s32 3, %v2244
  %v2246 = vrot.slane %v2207, %v2245
  %v2247 = vlaneseq
  %v2248 = vshrl.u32 %v2247, 7
  %v2249 = vsub.s32 3, %v2248
  %v2250 = vrot.slane %v2208, %v2249
  %v2251 = vlaneseq
  %v2252 = vshrl.u32 %v2251, 7
  %v2253 = vsub.s32 3, %v2252
  %v2254 = vrot.slane %v2209, %v2253
  %v2255 = vlaneseq
  %v2256 = vshrl.u32 %v2255, 7
  %v2257 = vsub.s32 3, %v2256
  %v2258 = vrot.slane %v2210, %v2257
  %v2259 = vsel %vm1158, %v2234, %v2230
  %v2260 = vsel %vm1160, %v2238, %v2259
  %v2261 = vsel %vm1162, %v2242, %v2260
  %v2262 = vsel %vm1164, %v2246, %v2261
  %v2263 = vsel %vm1166, %v2250, %v2262
  %v2264 = vsel %vm1168, %v2254, %v2263
  %v2265 = vsel %vm1170, %v2258, %v2264
  %2266 = vrot.lane.b32.xlu0 %v2265, 96
  %v2267 = vpop.permute.xlu0 %2266
  %v2268 = vsel %vm464, %v2267, 0
  %2270 = vmatprep.subr.mxu0 0.0
  %2271 = vmatpush1.msra.mxu0 0.0
  %2272 = vmatprep.subr.mxu0 0.0
  %2273 = vmatpush1.msra.mxu0 0.0
  %2274 = vmatprep.subr.mxu0 0.0
  %2275 = vmatpush1.msra.mxu0 0.0
  %2276 = vmatprep.subr.mxu0 0.0
  %2277 = vmatpush1.msra.mxu0 0.0
  %2278 = vmatprep.subr.mxu0 0.0
  %2279 = vmatpush1.msra.mxu0 0.0
  %2280 = vmatprep.subr.mxu0 0.0
  %2281 = vmatpush1.msra.mxu0 0.0
  %2282 = vmatprep.subr.mxu0 0.0
  %2283 = vmatpush1.msra.mxu0 0.0
  %2284 = vmatprep.subr.mxu0 0.0
  %2285 = vmatpush1.msra.mxu0 0.0
  %2286 = vmatprep.subr.mxu0 0.0
  %2287 = vmatpush1.msra.mxu0 0.0
  %2288 = vmatprep.subr.mxu0 0.0
  %2289 = vmatpush1.msra.mxu0 0.0
  %2290 = vmatprep.subr.mxu0 0.0
  %2291 = vmatpush1.msra.mxu0 0.0
  %2292 = vmatprep.subr.mxu0 0.0
  %2293 = vmatpush1.msra.mxu0 0.0
  %2294 = vmatprep.subr.mxu0 0.0
  %2295 = vmatpush1.msra.mxu0 %v2214
  %2296 = vmatprep.subr.mxu0 0.0
  %2297 = vmatpush1.msra.mxu0 %v2213
  %2298 = vmatprep.subr.mxu0 0.0
  %2299 = vmatpush1.msra.mxu0 %v2212
  %2300 = vmatprep.subr.mxu0 0.0
  %2301 = vmatpush1.msra.mxu0 %v2211
  %2302 = vmatprep.subr.mxu0 0.0
  %2303 = vmatpush2.msra.mxu0 0.0
  %2304 = vmatprep.subr.mxu0 0.0
  %2305 = vmatpush2.msra.mxu0 0.0
  %2306 = vmatprep.subr.mxu0 0.0
  %2307 = vmatpush2.msra.mxu0 0.0
  %2308 = vmatprep.subr.mxu0 0.0
  %2309 = vmatpush2.msra.mxu0 0.0
  %2310 = vmatprep.subr.mxu0 0.0
  %2311 = vmatpush2.msra.mxu0 0.0
  %2312 = vmatprep.subr.mxu0 0.0
  %2313 = vmatpush2.msra.mxu0 0.0
  %2314 = vmatprep.subr.mxu0 0.0
  %2315 = vmatpush2.msra.mxu0 0.0
  %2316 = vmatprep.subr.mxu0 0.0
  %2317 = vmatpush2.msra.mxu0 0.0
  %2318 = vmatprep.subr.mxu0 0.0
  %2319 = vmatpush2.msra.mxu0 0.0
  %2320 = vmatprep.subr.mxu0 0.0
  %2321 = vmatpush2.msra.mxu0 0.0
  %2322 = vmatprep.subr.mxu0 0.0
  %2323 = vmatpush2.msra.mxu0 0.0
  %2324 = vmatprep.subr.mxu0 0.0
  %2325 = vmatpush2.msra.mxu0 0.0
  %2326 = vmatprep.subr.mxu0 0.0
  %2327 = vmatpush2.msra.mxu0 0.0
  %2328 = vmatprep.subr.mxu0 0.0
  %2329 = vmatpush2.msra.mxu0 0.0
  %2330 = vmatprep.subr.mxu0 0.0
  %2331 = vmatpush2.msra.mxu0 0.0
  %2332 = vmatprep.subr.mxu0 0.0
  %2333 = vmatpush2.msra.mxu0 0.0
  %2334 = vmatprep.mubr.f32.mxu0 0.0
  %2335 = vmatmul.mubr.f32.gmra.mxu0 %v2268
  %v2336 = vpop.f32.mrf.mxu0
  %v2337 = vadd.f32 %v2218, %v2336
  %v2338 = vpop.f32.mrf.mxu0
  %2339 = vdwg.mxu0
  %v2340 = vmax.f32 %v2337, 0.0
  %v2341 = vld [vmem:[%s1 + $0xa0] sm:$0xff]
  %v2342 = vld [vmem:[%s1 + $0xa8] sm:$0xff]
  %v2343 = vld [vmem:[%s1 + $0xb0] sm:$0xff]
  %v2344 = vld [vmem:[%s1 + $0xb8] sm:$0xff]
  %v2345 = vld [vmem:[%s1 + $0xc0] sm:$0xff]
  %v2346 = vld [vmem:[%s1 + $0xc8] sm:$0xff]
  %v2347 = vld [vmem:[%s1 + $0xd0] sm:$0xff]
  %v2348 = vld [vmem:[%s1 + $0xd8] sm:$0xff]
  %v2349 = vld [vmem:[%s1 + $0xe0] sm:$0xff]
  %v2350 = vld [vmem:[%s1 + $0xe8] sm:$0xff]
  %v2351 = vld [vmem:[%s1 + $0xf0] sm:$0xff]
  %v2352 = vld [vmem:[%s1 + $0xf8] sm:$0xff]
  %v2353 = vld [vmem:[%s1 + $0x100] sm:$0xff]
  %v2354 = vld [vmem:[%s1 + $0x108] sm:$0xff]
  %v2355 = vld [vmem:[%s1 + $0x110] sm:$0xff]
  %v2356 = vld [vmem:[%s1 + $0x118] sm:$0xff]
  %v2357 = vld [vmem:[%s1 + $0x120] sm:$0xff]
  %v2358 = vld [vmem:[%s1 + $0x128] sm:$0xff]
  %v2359 = vld [vmem:[%s1 + $0x130] sm:$0xff]
  %v2360 = vld [vmem:[%s1 + $0x138] sm:$0xff]
  %2361 = vmatprep.subr.mxu0 0.0
  %2362 = vmatpush1.msra.mxu0 0.0
  %2363 = vmatprep.subr.mxu0 0.0
  %2364 = vmatpush1.msra.mxu0 0.0
  %2365 = vmatprep.subr.mxu0 0.0
  %2366 = vmatpush1.msra.mxu0 0.0
  %2367 = vmatprep.subr.mxu0 0.0
  %2368 = vmatpush1.msra.mxu0 0.0
  %2369 = vmatprep.subr.mxu0 0.0
  %2370 = vmatpush1.msra.mxu0 0.0
  %2371 = vmatprep.subr.mxu0 0.0
  %2372 = vmatpush1.msra.mxu0 0.0
  %2373 = vmatprep.subr.mxu0 0.0
  %2374 = vmatpush1.msra.mxu0 0.0
  %2375 = vmatprep.subr.mxu0 0.0
  %2376 = vmatpush1.msra.mxu0 0.0
  %2377 = vmatprep.subr.mxu0 0.0
  %2378 = vmatpush1.msra.mxu0 0.0
  %2379 = vmatprep.subr.mxu0 0.0
  %2380 = vmatpush1.msra.mxu0 0.0
  %2381 = vmatprep.subr.mxu0 0.0
  %2382 = vmatpush1.msra.mxu0 0.0
  %2383 = vmatprep.subr.mxu0 0.0
  %2384 = vmatpush1.msra.mxu0 0.0
  %2385 = vmatprep.subr.mxu0 0.0
  %2386 = vmatpush1.msra.mxu0 %v2360
  %2387 = vmatprep.subr.mxu0 0.0
  %2388 = vmatpush1.msra.mxu0 %v2359
  %2389 = vmatprep.subr.mxu0 0.0
  %2390 = vmatpush1.msra.mxu0 %v2358
  %2391 = vmatprep.subr.mxu0 0.0
  %2392 = vmatpush1.msra.mxu0 %v2357
  %2393 = vmatprep.subr.mxu0 0.0
  %2394 = vmatpush2.msra.mxu0 0.0
  %2395 = vmatprep.subr.mxu0 0.0
  %2396 = vmatpush2.msra.mxu0 0.0
  %2397 = vmatprep.subr.mxu0 0.0
  %2398 = vmatpush2.msra.mxu0 0.0
  %2399 = vmatprep.subr.mxu0 0.0
  %2400 = vmatpush2.msra.mxu0 0.0
  %2401 = vmatprep.subr.mxu0 0.0
  %2402 = vmatpush2.msra.mxu0 0.0
  %2403 = vmatprep.subr.mxu0 0.0
  %2404 = vmatpush2.msra.mxu0 0.0
  %2405 = vmatprep.subr.mxu0 0.0
  %2406 = vmatpush2.msra.mxu0 0.0
  %2407 = vmatprep.subr.mxu0 0.0
  %2408 = vmatpush2.msra.mxu0 0.0
  %2409 = vmatprep.subr.mxu0 0.0
  %2410 = vmatpush2.msra.mxu0 0.0
  %2411 = vmatprep.subr.mxu0 0.0
  %2412 = vmatpush2.msra.mxu0 0.0
  %2413 = vmatprep.subr.mxu0 0.0
  %2414 = vmatpush2.msra.mxu0 0.0
  %2415 = vmatprep.subr.mxu0 0.0
  %2416 = vmatpush2.msra.mxu0 0.0
  %2417 = vmatprep.subr.mxu0 0.0
  %2418 = vmatpush2.msra.mxu0 0.0
  %2419 = vmatprep.subr.mxu0 0.0
  %2420 = vmatpush2.msra.mxu0 0.0
  %2421 = vmatprep.subr.mxu0 0.0
  %2422 = vmatpush2.msra.mxu0 0.0
  %2423 = vmatprep.subr.mxu0 0.0
  %2424 = vmatpush2.msra.mxu0 0.0
  %2425 = vmatprep.mubr.f32.mxu0 0.0
  %2426 = vmatmul.mubr.f32.gmra.mxu0 %v2268
  %v2427 = vpop.f32.mrf.mxu0
  %v2428 = vadd.f32 0.0, %v2427
  %v2429 = vpop.f32.mrf.mxu0
  %2430 = vdwg.mxu0
  %2431 = vmatprep.subr.mxu0 0.0
  %2432 = vmatpush1.msra.mxu0 %v2356
  %2433 = vmatprep.subr.mxu0 0.0
  %2434 = vmatpush1.msra.mxu0 %v2355
  %2435 = vmatprep.subr.mxu0 0.0
  %2436 = vmatpush1.msra.mxu0 %v2354
  %2437 = vmatprep.subr.mxu0 0.0
  %2438 = vmatpush1.msra.mxu0 %v2353
  %2439 = vmatprep.subr.mxu0 0.0
  %2440 = vmatpush1.msra.mxu0 %v2352
  %2441 = vmatprep.subr.mxu0 0.0
  %2442 = vmatpush1.msra.mxu0 %v2351
  %2443 = vmatprep.subr.mxu0 0.0
  %2444 = vmatpush1.msra.mxu0 %v2350
  %2445 = vmatprep.subr.mxu0 0.0
  %2446 = vmatpush1.msra.mxu0 %v2349
  %2447 = vmatprep.subr.mxu0 0.0
  %2448 = vmatpush1.msra.mxu0 %v2348
  %2449 = vmatprep.subr.mxu0 0.0
  %2450 = vmatpush1.msra.mxu0 %v2347
  %2451 = vmatprep.subr.mxu0 0.0
  %2452 = vmatpush1.msra.mxu0 %v2346
  %2453 = vmatprep.subr.mxu0 0.0
  %2454 = vmatpush1.msra.mxu0 %v2345
  %2455 = vmatprep.subr.mxu0 0.0
  %2456 = vmatpush1.msra.mxu0 %v2344
  %2457 = vmatprep.subr.mxu0 0.0
  %2458 = vmatpush1.msra.mxu0 %v2343
  %2459 = vmatprep.subr.mxu0 0.0
  %2460 = vmatpush1.msra.mxu0 %v2342
  %2461 = vmatprep.subr.mxu0 0.0
  %2462 = vmatpush1.msra.mxu0 %v2341
  %2463 = vmatprep.subr.mxu0 0.0
  %2464 = vmatpush2.msra.mxu0 0.0
  %2465 = vmatprep.subr.mxu0 0.0
  %2466 = vmatpush2.msra.mxu0 0.0
  %2467 = vmatprep.subr.mxu0 0.0
  %2468 = vmatpush2.msra.mxu0 0.0
  %2469 = vmatprep.subr.mxu0 0.0
  %2470 = vmatpush2.msra.mxu0 0.0
  %2471 = vmatprep.subr.mxu0 0.0
  %2472 = vmatpush2.msra.mxu0 0.0
  %2473 = vmatprep.subr.mxu0 0.0
  %2474 = vmatpush2.msra.mxu0 0.0
  %2475 = vmatprep.subr.mxu0 0.0
  %2476 = vmatpush2.msra.mxu0 0.0
  %2477 = vmatprep.subr.mxu0 0.0
  %2478 = vmatpush2.msra.mxu0 0.0
  %2479 = vmatprep.subr.mxu0 0.0
  %2480 = vmatpush2.msra.mxu0 0.0
  %2481 = vmatprep.subr.mxu0 0.0
  %2482 = vmatpush2.msra.mxu0 0.0
  %2483 = vmatprep.subr.mxu0 0.0
  %2484 = vmatpush2.msra.mxu0 0.0
  %2485 = vmatprep.subr.mxu0 0.0
  %2486 = vmatpush2.msra.mxu0 0.0
  %2487 = vmatprep.subr.mxu0 0.0
  %2488 = vmatpush2.msra.mxu0 0.0
  %2489 = vmatprep.subr.mxu0 0.0
  %2490 = vmatpush2.msra.mxu0 0.0
  %2491 = vmatprep.subr.mxu0 0.0
  %2492 = vmatpush2.msra.mxu0 0.0
  %2493 = vmatprep.subr.mxu0 0.0
  %2494 = vmatpush2.msra.mxu0 0.0
  %2495 = vmatprep.mubr.f32.mxu0 0.0
  %2496 = vmatmul.mubr.f32.gmra.mxu0 %v2340
  %v2497 = vpop.f32.mrf.mxu0
  %v2498 = vadd.f32 %v2428, %v2497
  %v2499 = vpop.f32.mrf.mxu0
  %2500 = vdwg.mxu0
  %v2501 = vlaneseq
  %v2502 = vshrl.u32 %v2501, 7
  %v2503 = vsub.s32 5, %v2502
  %v2504 = vrot.slane %v14, %v2503
  %v2505 = vadd.f32 %v2498, %v2504
  %2506 = vst [vmem:[%s3] sm:$0xff] %v2505
  // Predicated region
  $region14: #{cnngru_forward.1} parent=0 // pred_check
    _
  $region15: #{cnngru_forward.1} parent=0 // pred_check_branch
    %2508 = sbr.rel (0) target = $region17
  $region16: #{cnngru_forward.1} parent=0 // pred_region
    _
  $region17: #{cnngru_forward.1} parent=0 // pred_fallthru
    _
  // Predicated region
  $region18: #{cnngru_forward.1} parent=0 // pred_check
    _
  $region19: #{cnngru_forward.1} parent=0 // pred_check_branch
    %2510 = sbr.rel (0) target = $region21
  $region20: #{cnngru_forward.1} parent=0 // pred_region
    _
  $region21: #{cnngru_forward.1} parent=0 // pred_fallthru
    _

</llo_original>
